<compile_context>
chip_gen: v7x
topology: tpu7x:2x2x1
jax: 0.10.0
libtpu: 0.0.40
codegen_flags: <defaults>
</compile_context>

<pallas_src>
import functools

import jax
import jax.numpy as jnp
from jax.experimental import pallas as pl
from jax.experimental.pallas import tpu as pltpu


# ----------------------------------------------------------------------------
# Fused Pallas kernel: qkv proj + block-local attention + out proj
# ----------------------------------------------------------------------------
def _fused_lra_kernel(x_ref, qkvw_ref, qkvb_ref, outw_ref, outb_ref, o_ref, *,
                      n_heads, head_dim, block_size):
    f32 = jnp.float32
    bf16 = jnp.bfloat16

    x = x_ref[0]                                      # (rows, C) f32
    rows, c = x.shape
    nb = rows // block_size                           # blocks handled this step
    scale = float(head_dim) ** -0.5

    # ---- fused QKV projection (bf16 MXU operands, f32 accumulation) --------
    # qkv_w columns were pre-reordered in the wrapper to [Q | K | V],
    # head-major within each slab.
    qkv = (
        jnp.dot(x.astype(bf16), qkvw_ref[...].astype(bf16),
                preferred_element_type=f32)
        + qkvb_ref[...]                                # (rows, 3C) f32
    )
    # one leading-dim split so every block/head slice below is a static view
    qkv = qkv.reshape(nb, block_size, 3 * c)           # (nb, bs, 3C)

    q = qkv[:, :, 0 * c:1 * c] * scale                 # scale q, not the scores
    k = qkv[:, :, 1 * c:2 * c]
    v = qkv[:, :, 2 * c:3 * c]

    # ---- block-local multi-head attention (batched over blocks) ------------
    head_outs = []
    for h in range(n_heads):                            # unrolled at trace time
        lo, hi = h * head_dim, (h + 1) * head_dim
        qh = q[:, :, lo:hi]                             # (nb, bs, hd)
        kh = k[:, :, lo:hi]
        vh = v[:, :, lo:hi]

        s = jnp.einsum("gqd,gkd->gqk",
                       qh.astype(bf16), kh.astype(bf16),
                       preferred_element_type=f32)      # (nb, bs, bs)
        # numerically-stable softmax, f32 math
        s = s - jnp.max(s, axis=-1, keepdims=True)
        p = jnp.exp(s)
        p = p * pl.reciprocal(jnp.sum(p, axis=-1, keepdims=True), approx=True)

        oh = jnp.einsum("gqk,gkd->gqd",
                        p.astype(bf16), vh.astype(bf16),
                        preferred_element_type=f32)     # (nb, bs, hd)
        head_outs.append(oh)

    attn = jnp.concatenate(head_outs, axis=-1)          # (nb, bs, C) head-major
    attn = attn.reshape(rows, c)                        # lane-dense (rows, C)

    # ---- output projection ---------------------------------------------------
    out = (
        jnp.dot(attn.astype(bf16), outw_ref[...].astype(bf16),
                preferred_element_type=f32)
        + outb_ref[...]
    )
    o_ref[0] = out.astype(o_ref.dtype)                  # lane-dense store, last dim C


# ----------------------------------------------------------------------------
# Wrapper
# ----------------------------------------------------------------------------
def long_range_attention(x, params, n_heads, block_size, *, target_chunk_rows=256):
    """Forward pass matching LongRangeAttention.forward (block-local attention)."""
    B, T, C = x.shape
    head_dim = C // n_heads
    assert head_dim * n_heads == C, "d_model must be divisible by n_heads"
    # TODO(synk): ragged final block (T % block_size != 0) not handled.
    assert T % block_size == 0, "T must be a multiple of block_size"
    n_blocks = T // block_size

    # How many attention blocks each grid step handles (amortize per-step
    # overhead; keep the double-buffered working set small enough for v7x).
    blocks_per_chunk = max(1, min(n_blocks, max(1, target_chunk_rows // block_size)))
    while n_blocks % blocks_per_chunk:
        blocks_per_chunk -= 1
    rows = blocks_per_chunk * block_size
    n_chunks = T // rows
    G = B * n_chunks

    # Pure leading-dim reshape: no HBM data movement.
    x_tiles = x.reshape(G, rows, C)

    # One-time reorder of the tiny qkv weight/bias so the projected feature
    # layout is [Q | K | V], head-major inside each slab.  Original nn.Linear
    # column layout is per-head interleaved: [q_h | k_h | v_h] for each head.
    qkv_w = params["qkv_w"].reshape(C, n_heads, 3, head_dim)
    qkv_w = jnp.transpose(qkv_w, (0, 2, 1, 3)).reshape(C, 3 * C)
    qkv_b = params["qkv_b"].reshape(n_heads, 3, head_dim)
    qkv_b = jnp.transpose(qkv_b, (1, 0, 2)).reshape(1, 3 * C)

    kernel = functools.partial(
        _fused_lra_kernel,
        n_heads=n_heads, head_dim=head_dim, block_size=block_size)

    chunk_spec = pl.BlockSpec((1, rows, C), lambda i: (i, 0, 0))

    def full_spec(shape):
        return pl.BlockSpec(shape, lambda i, _n=len(shape): (0,) * _n)

    out = pl.pallas_call(
        kernel,
        out_shape=jax.ShapeDtypeStruct((G, rows, C), x.dtype),
        grid_spec=pltpu.PrefetchScalarGridSpec(
            num_scalar_prefetch=0,
            grid=(G,),
            in_specs=[
                chunk_spec,                     # x chunk        (1, rows, C)
                full_spec((C, 3 * C)),          # qkv_w  (resident in VMEM)
                full_spec((1, 3 * C)),          # qkv_b
                full_spec((C, C)),              # out_w
                full_spec((1, C)),              # out_b
            ],
            out_specs=chunk_spec,
        ),
        compiler_params=pltpu.CompilerParams(
            dimension_semantics=("parallel",),      # shard chunks across TCs (v7x)
            vmem_limit_bytes=32 * 1024 * 1024,
        ),
    )(
        x_tiles,
        qkv_w,
        qkv_b,
        params["out_w"],
        params["out_b"].reshape(1, C),
    )
    return out.reshape(B, T, C)


# ----------------------------------------------------------------------------
# Pure-JAX reference (mirrors the PyTorch forward exactly)
# ----------------------------------------------------------------------------
def reference_forward(x, params, n_heads, block_size):
    B, T, C = x.shape
    head_dim = C // n_heads
    qkv = x @ params["qkv_w"] + params["qkv_b"]
    qkv = qkv.reshape(B, T, n_heads, 3 * head_dim)
    qkv = jnp.transpose(qkv, (0, 2, 1, 3))
    q, k, v = jnp.split(qkv, 3, axis=-1)
    outs = []
    for t in range(0, T, block_size):
        qb = q[:, :, t:t + block_size, :]
        kb = k[:, :, t:t + block_size, :]
        vb = v[:, :, t:t + block_size, :]
        w = jnp.einsum("bhqd,bhkd->bhqk", qb, kb) * head_dim ** -0.5
        w = jax.nn.softmax(w, axis=-1)
        outs.append(jnp.einsum("bhqk,bhkd->bhqd", w, vb))
    o = jnp.concatenate(outs, axis=2)
    o = jnp.transpose(o, (0, 2, 1, 3)).reshape(B, T, C)
    return (o @ params["out_w"] + params["out_b"]).reshape(B, T, C)


# ----------------------------------------------------------------------------
# Main
# ----------------------------------------------------------------------------
if __name__ == "__main__":
    # Small shapes consistent with the module.
    B, T, d_model, n_heads, block_size = 2, 16, 32, 4, 8

    key = jax.random.PRNGKey(0)
    k_x, k_qw, k_qb, k_ow, k_ob = jax.random.split(key, 5)

    x = jax.random.normal(k_x, (B, T, d_model), dtype=jnp.float32)

    # Deterministic parameter init (shapes per nn.Linear in the module,
    # weights pre-transposed to (in, out)).
    params = {
        "qkv_w": jax.random.normal(k_qw, (d_model, 3 * d_model), jnp.float32) * 0.05,
        "qkv_b": jax.random.normal(k_qb, (3 * d_model,), jnp.float32) * 0.05,
        "out_w": jax.random.normal(k_ow, (d_model, d_model), jnp.float32) * 0.05,
        "out_b": jax.random.normal(k_ob, (d_model,), jnp.float32) * 0.05,
    }

    fwd = jax.jit(lambda x: long_range_attention(x, params, n_heads, block_size))
    out = jax.block_until_ready(fwd(x))

    ref = reference_forward(x, params, n_heads, block_size)
    assert out.shape == (B, T, d_model)
    max_err = float(jnp.max(jnp.abs(out - ref)))
    # bf16 MXU operands + approx reciprocal => loosen tolerance vs f32 reference.
    assert max_err < 2e-2, f"mismatch vs reference: max abs err {max_err}"

    print("KERNEL_OK")
</pallas_src>

<mosaic_0001>
module attributes {stable_mosaic.version = 11 : i64} {
  func.func @_fused_lra_kernel(%arg0: i32, %arg1: memref<1x16x32xf32, #tpu.memory_space<vmem>>, %arg2: memref<32x96xf32, #tpu.memory_space<vmem>>, %arg3: memref<1x96xf32, #tpu.memory_space<vmem>>, %arg4: memref<32x32xf32, #tpu.memory_space<vmem>>, %arg5: memref<1x32xf32, #tpu.memory_space<vmem>>, %arg6: memref<1x16x32xf32, #tpu.memory_space<vmem>>) attributes {dimension_semantics = [#tpu.dimension_semantics<parallel>], iteration_bounds = array<i64: 2>, scalar_prefetch = 0 : i64, scratch_operands = 0 : i64, tpu.core_type = #tpu.core_type<tc>, window_params = [{transform_indices = @transform_0, window_bounds = array<i64: 1, 16, 32>}, {pipeline_mode = #tpu.pipeline_mode<synchronous>, transform_indices = @transform_1, window_bounds = array<i64: 32, 96>}, {pipeline_mode = #tpu.pipeline_mode<synchronous>, transform_indices = @transform_2, window_bounds = array<i64: 1, 96>}, {pipeline_mode = #tpu.pipeline_mode<synchronous>, transform_indices = @transform_3, window_bounds = array<i64: 32, 32>}, {pipeline_mode = #tpu.pipeline_mode<synchronous>, transform_indices = @transform_4, window_bounds = array<i64: 1, 32>}, {transform_indices = @transform_5, window_bounds = array<i64: 1, 16, 32>}]} {
    %c0 = arith.constant 0 : index
    %c0_0 = arith.constant 0 : index
    %c0_1 = arith.constant 0 : index
    %0 = vector.load %arg1[%c0, %c0_0, %c0_1] : memref<1x16x32xf32, #tpu.memory_space<vmem>>, vector<1x16x32xf32>
    %1 = vector.shape_cast %0 : vector<1x16x32xf32> to vector<16x32xf32>
    %2 = arith.truncf %1 : vector<16x32xf32> to vector<16x32xbf16>
    %c0_2 = arith.constant 0 : index
    %c0_3 = arith.constant 0 : index
    %3 = vector.load %arg2[%c0_2, %c0_3] : memref<32x96xf32, #tpu.memory_space<vmem>>, vector<32x96xf32>
    %4 = arith.truncf %3 : vector<32x96xf32> to vector<32x96xbf16>
    %cst = arith.constant dense<0.000000e+00> : vector<16x96xf32>
    %5 = tpu.matmul %2, %4, %cst {dimension_numbers = #tpu.dot_dimension_numbers<[1], [0], [0], [1], [0, 0, 1, 1], [], []>} : vector<16x32xbf16>, vector<32x96xbf16>, vector<16x96xf32> -> vector<16x96xf32>
    %c0_4 = arith.constant 0 : index
    %c0_5 = arith.constant 0 : index
    %6 = vector.load %arg3[%c0_4, %c0_5] : memref<1x96xf32, #tpu.memory_space<vmem>>, vector<1x96xf32>
    %7 = vector.broadcast %6 : vector<1x96xf32> to vector<16x96xf32>
    %8 = arith.addf %5, %7 : vector<16x96xf32>
    %9 = vector.shape_cast %8 : vector<16x96xf32> to vector<2x8x96xf32>
    %10 = vector.extract_strided_slice %9 {offsets = [0, 0, 0], sizes = [2, 8, 32], strides = [1, 1, 1]} : vector<2x8x96xf32> to vector<2x8x32xf32>
    %cst_6 = arith.constant 0.353553385 : f32
    %11 = vector.broadcast %cst_6 : f32 to vector<2x8x32xf32>
    %12 = arith.mulf %10, %11 : vector<2x8x32xf32>
    %13 = vector.extract_strided_slice %9 {offsets = [0, 0, 32], sizes = [2, 8, 32], strides = [1, 1, 1]} : vector<2x8x96xf32> to vector<2x8x32xf32>
    %14 = vector.extract_strided_slice %9 {offsets = [0, 0, 64], sizes = [2, 8, 32], strides = [1, 1, 1]} : vector<2x8x96xf32> to vector<2x8x32xf32>
    %15 = vector.extract_strided_slice %12 {offsets = [0, 0, 0], sizes = [2, 8, 8], strides = [1, 1, 1]} : vector<2x8x32xf32> to vector<2x8x8xf32>
    %16 = vector.extract_strided_slice %13 {offsets = [0, 0, 0], sizes = [2, 8, 8], strides = [1, 1, 1]} : vector<2x8x32xf32> to vector<2x8x8xf32>
    %17 = vector.extract_strided_slice %14 {offsets = [0, 0, 0], sizes = [2, 8, 8], strides = [1, 1, 1]} : vector<2x8x32xf32> to vector<2x8x8xf32>
    %18 = arith.truncf %15 : vector<2x8x8xf32> to vector<2x8x8xbf16>
    %19 = arith.truncf %16 : vector<2x8x8xf32> to vector<2x8x8xbf16>
    "tpu.trace_start"() <{level = 10 : i32, message = "gqd,gkd->gqk"}> : () -> ()
    %cst_7 = arith.constant dense<0.000000e+00> : vector<2x8x8xf32>
    %20 = tpu.matmul %18, %19, %cst_7 {dimension_numbers = #tpu.dot_dimension_numbers<[2], [2], [1], [1], [0, 0, 0, 1, 1, 1], [0], [0]>} : vector<2x8x8xbf16>, vector<2x8x8xbf16>, vector<2x8x8xf32> -> vector<2x8x8xf32>
    "tpu.trace_stop"() : () -> ()
    %cst_8 = arith.constant dense<0xFF800000> : vector<2x8xf32>
    %21 = vector.multi_reduction <maximumf>, %20, %cst_8 [2] : vector<2x8x8xf32> to vector<2x8xf32>
    %22 = vector.shape_cast %21 : vector<2x8xf32> to vector<2x8x1xf32>
    %23 = vector.broadcast %22 : vector<2x8x1xf32> to vector<2x8x8xf32>
    %24 = arith.subf %20, %23 : vector<2x8x8xf32>
    %25 = math.exp %24 : vector<2x8x8xf32>
    %cst_9 = arith.constant dense<0.000000e+00> : vector<2x8xf32>
    %26 = vector.multi_reduction <add>, %25, %cst_9 [2] : vector<2x8x8xf32> to vector<2x8xf32>
    %27 = vector.shape_cast %26 : vector<2x8xf32> to vector<2x8x1xf32>
    %28 = tpu.reciprocal %27 {approx = true} : vector<2x8x1xf32> -> vector<2x8x1xf32>
    %29 = vector.broadcast %28 : vector<2x8x1xf32> to vector<2x8x8xf32>
    %30 = arith.mulf %25, %29 : vector<2x8x8xf32>
    %31 = arith.truncf %30 : vector<2x8x8xf32> to vector<2x8x8xbf16>
    %32 = arith.truncf %17 : vector<2x8x8xf32> to vector<2x8x8xbf16>
    "tpu.trace_start"() <{level = 10 : i32, message = "gqk,gkd->gqd"}> : () -> ()
    %cst_10 = arith.constant dense<0.000000e+00> : vector<2x8x8xf32>
    %33 = tpu.matmul %31, %32, %cst_10 {dimension_numbers = #tpu.dot_dimension_numbers<[2], [1], [1], [2], [0, 0, 0, 1, 1, 2], [0], [0]>} : vector<2x8x8xbf16>, vector<2x8x8xbf16>, vector<2x8x8xf32> -> vector<2x8x8xf32>
    "tpu.trace_stop"() : () -> ()
    %34 = vector.extract_strided_slice %12 {offsets = [0, 0, 8], sizes = [2, 8, 8], strides = [1, 1, 1]} : vector<2x8x32xf32> to vector<2x8x8xf32>
    %35 = vector.extract_strided_slice %13 {offsets = [0, 0, 8], sizes = [2, 8, 8], strides = [1, 1, 1]} : vector<2x8x32xf32> to vector<2x8x8xf32>
    %36 = vector.extract_strided_slice %14 {offsets = [0, 0, 8], sizes = [2, 8, 8], strides = [1, 1, 1]} : vector<2x8x32xf32> to vector<2x8x8xf32>
    %37 = arith.truncf %34 : vector<2x8x8xf32> to vector<2x8x8xbf16>
    %38 = arith.truncf %35 : vector<2x8x8xf32> to vector<2x8x8xbf16>
    "tpu.trace_start"() <{level = 10 : i32, message = "gqd,gkd->gqk"}> : () -> ()
    %cst_11 = arith.constant dense<0.000000e+00> : vector<2x8x8xf32>
    %39 = tpu.matmul %37, %38, %cst_11 {dimension_numbers = #tpu.dot_dimension_numbers<[2], [2], [1], [1], [0, 0, 0, 1, 1, 1], [0], [0]>} : vector<2x8x8xbf16>, vector<2x8x8xbf16>, vector<2x8x8xf32> -> vector<2x8x8xf32>
    "tpu.trace_stop"() : () -> ()
    %cst_12 = arith.constant dense<0xFF800000> : vector<2x8xf32>
    %40 = vector.multi_reduction <maximumf>, %39, %cst_12 [2] : vector<2x8x8xf32> to vector<2x8xf32>
    %41 = vector.shape_cast %40 : vector<2x8xf32> to vector<2x8x1xf32>
    %42 = vector.broadcast %41 : vector<2x8x1xf32> to vector<2x8x8xf32>
    %43 = arith.subf %39, %42 : vector<2x8x8xf32>
    %44 = math.exp %43 : vector<2x8x8xf32>
    %cst_13 = arith.constant dense<0.000000e+00> : vector<2x8xf32>
    %45 = vector.multi_reduction <add>, %44, %cst_13 [2] : vector<2x8x8xf32> to vector<2x8xf32>
    %46 = vector.shape_cast %45 : vector<2x8xf32> to vector<2x8x1xf32>
    %47 = tpu.reciprocal %46 {approx = true} : vector<2x8x1xf32> -> vector<2x8x1xf32>
    %48 = vector.broadcast %47 : vector<2x8x1xf32> to vector<2x8x8xf32>
    %49 = arith.mulf %44, %48 : vector<2x8x8xf32>
    %50 = arith.truncf %49 : vector<2x8x8xf32> to vector<2x8x8xbf16>
    %51 = arith.truncf %36 : vector<2x8x8xf32> to vector<2x8x8xbf16>
    "tpu.trace_start"() <{level = 10 : i32, message = "gqk,gkd->gqd"}> : () -> ()
    %cst_14 = arith.constant dense<0.000000e+00> : vector<2x8x8xf32>
    %52 = tpu.matmul %50, %51, %cst_14 {dimension_numbers = #tpu.dot_dimension_numbers<[2], [1], [1], [2], [0, 0, 0, 1, 1, 2], [0], [0]>} : vector<2x8x8xbf16>, vector<2x8x8xbf16>, vector<2x8x8xf32> -> vector<2x8x8xf32>
    "tpu.trace_stop"() : () -> ()
    %53 = vector.extract_strided_slice %12 {offsets = [0, 0, 16], sizes = [2, 8, 8], strides = [1, 1, 1]} : vector<2x8x32xf32> to vector<2x8x8xf32>
    %54 = vector.extract_strided_slice %13 {offsets = [0, 0, 16], sizes = [2, 8, 8], strides = [1, 1, 1]} : vector<2x8x32xf32> to vector<2x8x8xf32>
    %55 = vector.extract_strided_slice %14 {offsets = [0, 0, 16], sizes = [2, 8, 8], strides = [1, 1, 1]} : vector<2x8x32xf32> to vector<2x8x8xf32>
    %56 = arith.truncf %53 : vector<2x8x8xf32> to vector<2x8x8xbf16>
    %57 = arith.truncf %54 : vector<2x8x8xf32> to vector<2x8x8xbf16>
    "tpu.trace_start"() <{level = 10 : i32, message = "gqd,gkd->gqk"}> : () -> ()
    %cst_15 = arith.constant dense<0.000000e+00> : vector<2x8x8xf32>
    %58 = tpu.matmul %56, %57, %cst_15 {dimension_numbers = #tpu.dot_dimension_numbers<[2], [2], [1], [1], [0, 0, 0, 1, 1, 1], [0], [0]>} : vector<2x8x8xbf16>, vector<2x8x8xbf16>, vector<2x8x8xf32> -> vector<2x8x8xf32>
    "tpu.trace_stop"() : () -> ()
    %cst_16 = arith.constant dense<0xFF800000> : vector<2x8xf32>
    %59 = vector.multi_reduction <maximumf>, %58, %cst_16 [2] : vector<2x8x8xf32> to vector<2x8xf32>
    %60 = vector.shape_cast %59 : vector<2x8xf32> to vector<2x8x1xf32>
    %61 = vector.broadcast %60 : vector<2x8x1xf32> to vector<2x8x8xf32>
    %62 = arith.subf %58, %61 : vector<2x8x8xf32>
    %63 = math.exp %62 : vector<2x8x8xf32>
    %cst_17 = arith.constant dense<0.000000e+00> : vector<2x8xf32>
    %64 = vector.multi_reduction <add>, %63, %cst_17 [2] : vector<2x8x8xf32> to vector<2x8xf32>
    %65 = vector.shape_cast %64 : vector<2x8xf32> to vector<2x8x1xf32>
    %66 = tpu.reciprocal %65 {approx = true} : vector<2x8x1xf32> -> vector<2x8x1xf32>
    %67 = vector.broadcast %66 : vector<2x8x1xf32> to vector<2x8x8xf32>
    %68 = arith.mulf %63, %67 : vector<2x8x8xf32>
    %69 = arith.truncf %68 : vector<2x8x8xf32> to vector<2x8x8xbf16>
    %70 = arith.truncf %55 : vector<2x8x8xf32> to vector<2x8x8xbf16>
    "tpu.trace_start"() <{level = 10 : i32, message = "gqk,gkd->gqd"}> : () -> ()
    %cst_18 = arith.constant dense<0.000000e+00> : vector<2x8x8xf32>
    %71 = tpu.matmul %69, %70, %cst_18 {dimension_numbers = #tpu.dot_dimension_numbers<[2], [1], [1], [2], [0, 0, 0, 1, 1, 2], [0], [0]>} : vector<2x8x8xbf16>, vector<2x8x8xbf16>, vector<2x8x8xf32> -> vector<2x8x8xf32>
    "tpu.trace_stop"() : () -> ()
    %72 = vector.extract_strided_slice %12 {offsets = [0, 0, 24], sizes = [2, 8, 8], strides = [1, 1, 1]} : vector<2x8x32xf32> to vector<2x8x8xf32>
    %73 = vector.extract_strided_slice %13 {offsets = [0, 0, 24], sizes = [2, 8, 8], strides = [1, 1, 1]} : vector<2x8x32xf32> to vector<2x8x8xf32>
    %74 = vector.extract_strided_slice %14 {offsets = [0, 0, 24], sizes = [2, 8, 8], strides = [1, 1, 1]} : vector<2x8x32xf32> to vector<2x8x8xf32>
    %75 = arith.truncf %72 : vector<2x8x8xf32> to vector<2x8x8xbf16>
    %76 = arith.truncf %73 : vector<2x8x8xf32> to vector<2x8x8xbf16>
    "tpu.trace_start"() <{level = 10 : i32, message = "gqd,gkd->gqk"}> : () -> ()
    %cst_19 = arith.constant dense<0.000000e+00> : vector<2x8x8xf32>
    %77 = tpu.matmul %75, %76, %cst_19 {dimension_numbers = #tpu.dot_dimension_numbers<[2], [2], [1], [1], [0, 0, 0, 1, 1, 1], [0], [0]>} : vector<2x8x8xbf16>, vector<2x8x8xbf16>, vector<2x8x8xf32> -> vector<2x8x8xf32>
    "tpu.trace_stop"() : () -> ()
    %cst_20 = arith.constant dense<0xFF800000> : vector<2x8xf32>
    %78 = vector.multi_reduction <maximumf>, %77, %cst_20 [2] : vector<2x8x8xf32> to vector<2x8xf32>
    %79 = vector.shape_cast %78 : vector<2x8xf32> to vector<2x8x1xf32>
    %80 = vector.broadcast %79 : vector<2x8x1xf32> to vector<2x8x8xf32>
    %81 = arith.subf %77, %80 : vector<2x8x8xf32>
    %82 = math.exp %81 : vector<2x8x8xf32>
    %cst_21 = arith.constant dense<0.000000e+00> : vector<2x8xf32>
    %83 = vector.multi_reduction <add>, %82, %cst_21 [2] : vector<2x8x8xf32> to vector<2x8xf32>
    %84 = vector.shape_cast %83 : vector<2x8xf32> to vector<2x8x1xf32>
    %85 = tpu.reciprocal %84 {approx = true} : vector<2x8x1xf32> -> vector<2x8x1xf32>
    %86 = vector.broadcast %85 : vector<2x8x1xf32> to vector<2x8x8xf32>
    %87 = arith.mulf %82, %86 : vector<2x8x8xf32>
    %88 = arith.truncf %87 : vector<2x8x8xf32> to vector<2x8x8xbf16>
    %89 = arith.truncf %74 : vector<2x8x8xf32> to vector<2x8x8xbf16>
    "tpu.trace_start"() <{level = 10 : i32, message = "gqk,gkd->gqd"}> : () -> ()
    %cst_22 = arith.constant dense<0.000000e+00> : vector<2x8x8xf32>
    %90 = tpu.matmul %88, %89, %cst_22 {dimension_numbers = #tpu.dot_dimension_numbers<[2], [1], [1], [2], [0, 0, 0, 1, 1, 2], [0], [0]>} : vector<2x8x8xbf16>, vector<2x8x8xbf16>, vector<2x8x8xf32> -> vector<2x8x8xf32>
    "tpu.trace_stop"() : () -> ()
    %91 = tpu.concatenate %33, %52, %71, %90 in 2 : vector<2x8x8xf32>, vector<2x8x8xf32>, vector<2x8x8xf32>, vector<2x8x8xf32> -> vector<2x8x32xf32>
    %92 = vector.shape_cast %91 : vector<2x8x32xf32> to vector<16x32xf32>
    %93 = arith.truncf %92 : vector<16x32xf32> to vector<16x32xbf16>
    %c0_23 = arith.constant 0 : index
    %c0_24 = arith.constant 0 : index
    %94 = vector.load %arg4[%c0_23, %c0_24] : memref<32x32xf32, #tpu.memory_space<vmem>>, vector<32x32xf32>
    %95 = arith.truncf %94 : vector<32x32xf32> to vector<32x32xbf16>
    %cst_25 = arith.constant dense<0.000000e+00> : vector<16x32xf32>
    %96 = tpu.matmul %93, %95, %cst_25 {dimension_numbers = #tpu.dot_dimension_numbers<[1], [0], [0], [1], [0, 0, 1, 1], [], []>} : vector<16x32xbf16>, vector<32x32xbf16>, vector<16x32xf32> -> vector<16x32xf32>
    %c0_26 = arith.constant 0 : index
    %c0_27 = arith.constant 0 : index
    %97 = vector.load %arg5[%c0_26, %c0_27] : memref<1x32xf32, #tpu.memory_space<vmem>>, vector<1x32xf32>
    %98 = vector.broadcast %97 : vector<1x32xf32> to vector<16x32xf32>
    %99 = arith.addf %96, %98 : vector<16x32xf32>
    %c0_28 = arith.constant 0 : index
    %c0_29 = arith.constant 0 : index
    %c0_30 = arith.constant 0 : index
    %100 = vector.load %arg6[%c0_28, %c0_29, %c0_30] : memref<1x16x32xf32, #tpu.memory_space<vmem>>, vector<1x16x32xf32>
    %101 = vector.shape_cast %100 : vector<1x16x32xf32> to vector<16x32xf32>
    %102 = vector.shape_cast %99 : vector<16x32xf32> to vector<1x16x32xf32>
    tpu.vector_store %arg6[%c0_28, %c0_29, %c0_30], %102 {strides = array<i32>} : memref<1x16x32xf32, #tpu.memory_space<vmem>>, vector<1x16x32xf32>,
    return
  }
  func.func @transform_0(%arg0: i32) -> (i32, i32, i32) {
    %c0_i32 = arith.constant 0 : i32
    %c0_i32_0 = arith.constant 0 : i32
    %c0_i32_1 = arith.constant 0 : i32
    return %arg0, %c0_i32, %c0_i32_0 : i32, i32, i32
  }
  func.func @transform_1(%arg0: i32) -> (i32, i32) {
    %c0_i32 = arith.constant 0 : i32
    %c0_i32_0 = arith.constant 0 : i32
    %c0_i32_1 = arith.constant 0 : i32
    return %c0_i32, %c0_i32_0 : i32, i32
  }
  func.func @transform_2(%arg0: i32) -> (i32, i32) {
    %c0_i32 = arith.constant 0 : i32
    %c0_i32_0 = arith.constant 0 : i32
    %c0_i32_1 = arith.constant 0 : i32
    return %c0_i32, %c0_i32_0 : i32, i32
  }
  func.func @transform_3(%arg0: i32) -> (i32, i32) {
    %c0_i32 = arith.constant 0 : i32
    %c0_i32_0 = arith.constant 0 : i32
    %c0_i32_1 = arith.constant 0 : i32
    return %c0_i32, %c0_i32_0 : i32, i32
  }
  func.func @transform_4(%arg0: i32) -> (i32, i32) {
    %c0_i32 = arith.constant 0 : i32
    %c0_i32_0 = arith.constant 0 : i32
    %c0_i32_1 = arith.constant 0 : i32
    return %c0_i32, %c0_i32_0 : i32, i32
  }
  func.func @transform_5(%arg0: i32) -> (i32, i32, i32) {
    %c0_i32 = arith.constant 0 : i32
    %c0_i32_0 = arith.constant 0 : i32
    %c0_i32_1 = arith.constant 0 : i32
    return %arg0, %c0_i32, %c0_i32_0 : i32, i32, i32
  }
}

</mosaic_0001>

<llo_original>
// kernel: _lambda_.1
$region0: #{_lambda_.1}
  #allocation0 [shape = 'u32[]', space=smem, size = 0x4, offset = 0x4, fixed_abs, tag = 'smem constant byte address 0x4 - core index']
  #allocation1 [shape = 'u32[144,128]{1,0:T(1,128)}', space=vmem, size = 0x12000, scoped, tag = 'internal scratch']
  %s0 = inlined_call_operand.hbm [shape: f32[2,16,32], index: 0, kind: input, shape index: {}]
  %s1 = inlined_call_operand.hbm [shape: f32[32,96], index: 1, kind: input, shape index: {}]
  %s2 = inlined_call_operand.vmem [shape: f32[1,96], index: 2, kind: input, shape index: {}]
  %s3 = inlined_call_operand.hbm [shape: f32[32,32], index: 3, kind: input, shape index: {}]
  %s4 = inlined_call_operand.vmem [shape: f32[1,32], index: 4, kind: input, shape index: {}]
  %s5 = inlined_call_operand.hbm [shape: f32[2,16,32], index: 5, kind: output, shape index: {}]
  %s6 = sld [smem:[#allocation0]]
  $region65: #{_lambda_.1} parent=0
    _
  %s8 = ssub.s32 1, %s6
  %s9 = scalar_select 0, %s8, %s6
  $region1: #{_lambda_.1} parent=0
    #allocation2 [shape = 'u8[16384]{0}', space=vmem, size = 0x4000, scoped, tag = 'input window, operand 0']
    #allocation3 [shape = 's32[2]{0}', space=sflag, size = 0x8, scoped, tag = 'scoped memory for _lambda_.1']
    #allocation4 [shape = 's32[2]{0}', space=sflag, size = 0x8, scoped, tag = 'scoped memory for _lambda_.1']
    #allocation5 [shape = 'u8[16384]{0}', space=vmem, size = 0x4000, scoped, tag = 'input window, operand 1, single buffered']
    #allocation6 [shape = 's32[1]{0}', space=sflag, size = 0x4, scoped, tag = 'scoped memory for _lambda_.1']
    #allocation7 [shape = 'u8[16384]{0}', space=vmem, size = 0x4000, scoped, tag = 'input window, operand 3, single buffered']
    #allocation8 [shape = 'u8[16384]{0}', space=vmem, size = 0x4000, scoped, tag = 'output window, operand 0']
    %10 = vsyncpa [#allocation3], 0
    %s11 = scalar_lea.sflag [#allocation3], 1
    %12 = vsyncpa %s11, 0
    %13 = vsyncpa [#allocation6], 0
    %14 = vsyncpa [#allocation4], 0
    %s15 = scalar_lea.sflag [#allocation4], 1
    %16 = vsyncpa %s15, 0
    loop: start=0, step=1, limit=4
    $region2: #{_lambda_.1} parent=1 // loop_pre_header
      _
    $region3: #{_lambda_.1} parent=1 // loop_header
      %s18 = sphi 0, %s22
      %p19 = scmp.ge.s32.totalorder %s18, 4
      %s28 = sphi 0, %s30
      %s31 = sphi 0, %s28
      %s32 = sphi 0, %s31
      %s48 = sphi 0, %s32
      %s52 = sphi 0, %s52
      %s54 = sphi 0, %s52
      %s55 = sphi 0, %s54
      %s69 = sphi 0, %s55
      %s73 = sphi 0, %s73
      %s75 = sphi 0, %s73
      %s76 = sphi 0, %s75
      %s90 = sphi 0, %s76
      %s94 = sphi 0, %s94
      %s96 = sphi 0, %s94
      %s97 = sphi 0, %s96
      %s111 = sphi 0, %s97
      %s115 = sphi 0, %s115
      %s117 = sphi 0, %s115
      %s118 = sphi 0, %s117
      %s132 = sphi 0, %s118
      %s138 = sphi 0, %s140
      %s141 = sphi 0, %s138
      %s142 = sphi 0, %s141
      %s158 = sphi 0, %s142
    $region4: #{_lambda_.1} parent=1 // loop_header_branch
      %21 = sbr.rel (%p19) target = $region8
    $region5: #{_lambda_.1} parent=1 // loop_body
      %s23 = ssub.s32 %s18, 1
      %s24 = ssub.s32 %s18, 2
      %s25 = sadd.s32 %s18, 1
      %s26 = ssub.s32 %s18, %s25
      %p27 = scmp.eq.s32.totalorder %s26, 0
      %s29 = sadd.s32 %s28, 1
      %s30 = scalar_select %p27, %s28, %s29
      %p33 = pneg %p27
      %p34 = scmp.eq.s32.totalorder %s18, 1
      %p35 = por %p33, %p34
      %p36 = scmp.ne.s32.totalorder %s28, %s31
      %p37 = scmp.eq.s32.totalorder %s18, 0
      %p38 = por %p36, %p37
      %p39 = scmp.ne.s32.totalorder %s28, %s31
      %p40 = scmp.eq.s32.totalorder %s23, 1
      %p41 = por %p39, %p40
      %p42 = scmp.ne.s32.totalorder %s31, %s32
      %p43 = scmp.eq.s32.totalorder %s23, 0
      %p44 = por %p42, %p43
      %p45 = scmp.ne.s32.totalorder %s31, %s32
      %p46 = scmp.eq.s32.totalorder %s24, 1
      %p47 = por %p45, %p46
      %p49 = scmp.ne.s32.totalorder %s32, %s48
      %p50 = scmp.eq.s32.totalorder %s24, 0
      %p51 = por %p49, %p50
      %s53 = sadd.s32 %s52, 1
      %p56 = scmp.eq.s32.totalorder %s18, 1
      %p57 = scmp.ne.s32.totalorder %s52, %s54
      %p58 = scmp.eq.s32.totalorder %s18, 0
      %p59 = por %p57, %p58
      %p60 = scmp.ne.s32.totalorder %s52, %s54
      %p61 = scmp.eq.s32.totalorder %s23, 1
      %p62 = por %p60, %p61
      %p63 = scmp.ne.s32.totalorder %s54, %s55
      %p64 = scmp.eq.s32.totalorder %s23, 0
      %p65 = por %p63, %p64
      %p66 = scmp.ne.s32.totalorder %s54, %s55
      %p67 = scmp.eq.s32.totalorder %s24, 1
      %p68 = por %p66, %p67
      %p70 = scmp.ne.s32.totalorder %s55, %s69
      %p71 = scmp.eq.s32.totalorder %s24, 0
      %p72 = por %p70, %p71
      %s74 = sadd.s32 %s73, 1
      %p77 = scmp.eq.s32.totalorder %s18, 1
      %p78 = scmp.ne.s32.totalorder %s73, %s75
      %p79 = scmp.eq.s32.totalorder %s18, 0
      %p80 = por %p78, %p79
      %p81 = scmp.ne.s32.totalorder %s73, %s75
      %p82 = scmp.eq.s32.totalorder %s23, 1
      %p83 = por %p81, %p82
      %p84 = scmp.ne.s32.totalorder %s75, %s76
      %p85 = scmp.eq.s32.totalorder %s23, 0
      %p86 = por %p84, %p85
      %p87 = scmp.ne.s32.totalorder %s75, %s76
      %p88 = scmp.eq.s32.totalorder %s24, 1
      %p89 = por %p87, %p88
      %p91 = scmp.ne.s32.totalorder %s76, %s90
      %p92 = scmp.eq.s32.totalorder %s24, 0
      %p93 = por %p91, %p92
      %s95 = sadd.s32 %s94, 1
      %p98 = scmp.eq.s32.totalorder %s18, 1
      %p99 = scmp.ne.s32.totalorder %s94, %s96
      %p100 = scmp.eq.s32.totalorder %s18, 0
      %p101 = por %p99, %p100
      %p102 = scmp.ne.s32.totalorder %s94, %s96
      %p103 = scmp.eq.s32.totalorder %s23, 1
      %p104 = por %p102, %p103
      %p105 = scmp.ne.s32.totalorder %s96, %s97
      %p106 = scmp.eq.s32.totalorder %s23, 0
      %p107 = por %p105, %p106
      %p108 = scmp.ne.s32.totalorder %s96, %s97
      %p109 = scmp.eq.s32.totalorder %s24, 1
      %p110 = por %p108, %p109
      %p112 = scmp.ne.s32.totalorder %s97, %s111
      %p113 = scmp.eq.s32.totalorder %s24, 0
      %p114 = por %p112, %p113
      %s116 = sadd.s32 %s115, 1
      %p119 = scmp.eq.s32.totalorder %s18, 1
      %p120 = scmp.ne.s32.totalorder %s115, %s117
      %p121 = scmp.eq.s32.totalorder %s18, 0
      %p122 = por %p120, %p121
      %p123 = scmp.ne.s32.totalorder %s115, %s117
      %p124 = scmp.eq.s32.totalorder %s23, 1
      %p125 = por %p123, %p124
      %p126 = scmp.ne.s32.totalorder %s117, %s118
      %p127 = scmp.eq.s32.totalorder %s23, 0
      %p128 = por %p126, %p127
      %p129 = scmp.ne.s32.totalorder %s117, %s118
      %p130 = scmp.eq.s32.totalorder %s24, 1
      %p131 = por %p129, %p130
      %p133 = scmp.ne.s32.totalorder %s118, %s132
      %p134 = scmp.eq.s32.totalorder %s24, 0
      %p135 = por %p133, %p134
      %s136 = ssub.s32 %s18, %s25
      %p137 = scmp.eq.s32.totalorder %s136, 0
      %s139 = sadd.s32 %s138, 1
      %s140 = scalar_select %p137, %s138, %s139
      %p143 = pneg %p137
      %p144 = scmp.eq.s32.totalorder %s18, 1
      %p145 = por %p143, %p144
      %p146 = scmp.ne.s32.totalorder %s138, %s141
      %p147 = scmp.eq.s32.totalorder %s18, 0
      %p148 = por %p146, %p147
      %p149 = scmp.ne.s32.totalorder %s138, %s141
      %p150 = scmp.eq.s32.totalorder %s23, 1
      %p151 = por %p149, %p150
      %p152 = scmp.ne.s32.totalorder %s141, %s142
      %p153 = scmp.eq.s32.totalorder %s23, 0
      %p154 = por %p152, %p153
      %p155 = scmp.ne.s32.totalorder %s141, %s142
      %p156 = scmp.eq.s32.totalorder %s24, 1
      %p157 = por %p155, %p156
      %p159 = scmp.ne.s32.totalorder %s142, %s158
      %p160 = scmp.eq.s32.totalorder %s24, 0
      %p161 = por %p159, %p160
      %p162 = scmp.le.s32.totalorder 1, %s18
      %p163 = scmp.lt.s32.totalorder %s18, 3
      %p164 = pnand %p162, %p163
      %p165 = pneg %p164
      // Predicated region
      $region9: #{_lambda_.1} parent=5 // pred_check
        _
      $region10: #{_lambda_.1} parent=5 // pred_check_branch
        %167 = sbr.rel (%p164) target = $region12
      $region11: #{_lambda_.1} parent=5 // pred_region
        %s168 = ssub.s32 %s18, 1
        // Predicated region
        $region13: #{_lambda_.1} parent=11 // pred_check
          %p169 = pneg %p65
        $region14: #{_lambda_.1} parent=11 // pred_check_branch
          %171 = sbr.rel (%p169) target = $region16
        $region15: #{_lambda_.1} parent=11 // pred_region
          %s173 = ssub.s32 512, 512
          %174 = vsyncadd [#allocation6], %s173
          %s175 = sshll.u32 [#allocation5], 4
          %s176 = int_to_ptr.vmem [resolvable:$true] %s175
          %181 = dma.hbm_to_vmem [thread:$0]  %s1, 512, %s176, [#allocation6], 128, 128, 8
        $region16: #{_lambda_.1} parent=11 // pred_fallthru
          _
        // Predicated region
        $region17: #{_lambda_.1} parent=11 // pred_check
          %p182 = pneg %p86
        $region18: #{_lambda_.1} parent=11 // pred_check_branch
          %184 = sbr.rel (%p182) target = $region20
        $region19: #{_lambda_.1} parent=11 // pred_region
          _
        $region20: #{_lambda_.1} parent=11 // pred_fallthru
          _
        // Predicated region
        $region21: #{_lambda_.1} parent=11 // pred_check
          %p185 = pneg %p107
        $region22: #{_lambda_.1} parent=11 // pred_check_branch
          %187 = sbr.rel (%p185) target = $region24
        $region23: #{_lambda_.1} parent=11 // pred_region
          %s189 = ssub.s32 512, 512
          %190 = vsyncadd [#allocation6], %s189
          %s191 = sshll.u32 [#allocation7], 4
          %s192 = int_to_ptr.vmem [resolvable:$true] %s191
          %197 = dma.hbm_to_vmem [thread:$0]  %s3, 512, %s192, [#allocation6], 128, 128, 8
        $region24: #{_lambda_.1} parent=11 // pred_fallthru
          _
        // Predicated region
        $region25: #{_lambda_.1} parent=11 // pred_check
          %p198 = pneg %p128
        $region26: #{_lambda_.1} parent=11 // pred_check_branch
          %200 = sbr.rel (%p198) target = $region28
        $region27: #{_lambda_.1} parent=11 // pred_region
          _
        $region28: #{_lambda_.1} parent=11 // pred_fallthru
          _
      $region12: #{_lambda_.1} parent=5 // pred_fallthru
        _
      %p201 = scmp.lt.s32.totalorder %s18, 2
      // Predicated region
      $region29: #{_lambda_.1} parent=5 // pred_check
        %p202 = pneg %p201
      $region30: #{_lambda_.1} parent=5 // pred_check_branch
        %204 = sbr.rel (%p202) target = $region32
      $region31: #{_lambda_.1} parent=5 // pred_region
        // Predicated region
        $region33: #{_lambda_.1} parent=31 // pred_check
          %p205 = pneg %p38
        $region34: #{_lambda_.1} parent=31 // pred_check_branch
          %207 = sbr.rel (%p205) target = $region36
        $region35: #{_lambda_.1} parent=31 // pred_region
          %s208 = sand.u32 %s28, 1
          %s209 = scalar_lea.sflag [#allocation3], %s208
          %s210 = sand.u32 %s28, 1
          %s211 = smul.addr %s210, 16
          %s212 = scalar_lea.vmem [#allocation2], %s211
          %s214 = ssub.s32 256, 256
          %215 = vsyncadd %s209, %s214
          %s216 = smul.addr %s18, 2
          %s217 = smul.addr %s216, 128
          %s218 = scalar_lea.hbm %s0, %s217
          %s219 = sshll.u32 %s212, 4
          %s220 = int_to_ptr.vmem [resolvable:$true] %s219
          %225 = dma.hbm_to_vmem [thread:$0]  %s218, 256, %s220, %s209, 128, 128, 8
        $region36: #{_lambda_.1} parent=31 // pred_fallthru
          _
      $region32: #{_lambda_.1} parent=5 // pred_fallthru
        _
      %p226 = scmp.le.s32.totalorder 1, %s18
      %p227 = scmp.lt.s32.totalorder %s18, 3
      %p228 = pnand %p226, %p227
      %p229 = pneg %p228
      // Predicated region
      $region37: #{_lambda_.1} parent=5 // pred_check
        _
      $region38: #{_lambda_.1} parent=5 // pred_check_branch
        %231 = sbr.rel (%p228) target = $region40
      $region39: #{_lambda_.1} parent=5 // pred_region
        %s232 = ssub.s32 %s18, 1
        %s233 = sand.u32 %s31, 1
        %s234 = scalar_lea.sflag [#allocation3], %s233
        %s235 = sand.u32 %s31, 1
        %s236 = smul.addr %s235, 16
        %s237 = scalar_lea.vmem [#allocation2], %s236
        // Predicated region
        $region41: #{_lambda_.1} parent=39 // pred_check
          %p238 = pneg %p44
        $region42: #{_lambda_.1} parent=39 // pred_check_branch
          %240 = sbr.rel (%p238) target = $region44
        $region43: #{_lambda_.1} parent=39 // pred_region
          %241 = dma.done %s234, 256
        $region44: #{_lambda_.1} parent=39 // pred_fallthru
          _
        // Predicated region
        $region45: #{_lambda_.1} parent=39 // pred_check
          %p242 = pneg %p65
        $region46: #{_lambda_.1} parent=39 // pred_check_branch
          %244 = sbr.rel (%p242) target = $region48
        $region47: #{_lambda_.1} parent=39 // pred_region
          %245 = dma.done [#allocation6], 512
        $region48: #{_lambda_.1} parent=39 // pred_fallthru
          _
        // Predicated region
        $region49: #{_lambda_.1} parent=39 // pred_check
          %p246 = pneg %p107
        $region50: #{_lambda_.1} parent=39 // pred_check_branch
          %248 = sbr.rel (%p246) target = $region52
        $region51: #{_lambda_.1} parent=39 // pred_region
          %249 = dma.done [#allocation6], 512
        $region52: #{_lambda_.1} parent=39 // pred_fallthru
          _
        %s250 = sand.u32 %s31, 1
        %s251 = scalar_lea.sflag [#allocation3], %s250
        %s252 = sand.u32 %s31, 1
        %s253 = smul.addr %s252, 16
        %s254 = scalar_lea.vmem [#allocation2], %s253
        %p255 = pneg %p44
        %p256 = pneg %p41
        %p257 = pneg %p65
        %p258 = pneg %p62
        %p259 = pneg %p86
        %p260 = pneg %p83
        %p261 = pneg %p107
        %p262 = pneg %p104
        %p263 = pneg %p128
        %p264 = pneg %p125
        %p265 = pneg %p154
        %p266 = pneg %p151
        %s267 = sand.u32 %s141, 1
        %s268 = scalar_lea.sflag [#allocation4], %s267
        %s269 = sand.u32 %s141, 1
        %s270 = smul.addr %s269, 16
        %s271 = scalar_lea.vmem [#allocation8], %s270
        %v273 = vld [vmem:[%s237] sm:$0xff]
        %v274 = vld [vmem:[%s237 + $0x8] sm:$0xff]
        %v275 = vpack.c.bf16 %v274, %v273
        %v276 = vld [vmem:[#allocation5] sm:$0xff]
        %v277 = vld [vmem:[#allocation5 + $0x8] sm:$0xff]
        %v278 = vld [vmem:[#allocation5 + $0x10] sm:$0xff]
        %v279 = vld [vmem:[#allocation5 + $0x18] sm:$0xff]
        %v280 = vpack.c.bf16 %v277, %v276
        %v281 = vpack.c.bf16 %v279, %v278
        %v282 = vld [vmem:[%s2] sm:$0x1]
        %v284 = vlaneseq
        %v285 = vshrl.u32 %v284, 7
        %v286 = vsub.s32 0, %v285
        %v287 = vrot.slane %v282, %v286
        %vm289 = vcmask 261120
        %v291 = vsel %vm289, %v275, 0
        %293 = vmatprep.subr.bf16.mxu0 0
        %294 = vmatpush1.bf16.msra.mxu0 %v280
        %295 = vmatprep.subr.bf16.mxu0 0
        %296 = vmatpush1.bf16.msra.mxu0 %v281
        %297 = vmatprep.subr.bf16.mxu0 0
        %298 = vmatpush1.bf16.msra.mxu0 0
        %299 = vmatprep.subr.bf16.mxu0 0
        %300 = vmatpush1.bf16.msra.mxu0 0
        %301 = vmatprep.subr.bf16.mxu0 0
        %302 = vmatpush1.bf16.msra.mxu0 0
        %303 = vmatprep.subr.bf16.mxu0 0
        %304 = vmatpush1.bf16.msra.mxu0 0
        %305 = vmatprep.subr.bf16.mxu0 0
        %306 = vmatpush1.bf16.msra.mxu0 0
        %307 = vmatprep.subr.bf16.mxu0 0
        %308 = vmatpush1.bf16.msra.mxu0 0
        %309 = vmatprep.subr.bf16.mxu0 0
        %310 = vmatpush1.bf16.msra.mxu0 0
        %311 = vmatprep.subr.bf16.mxu0 0
        %312 = vmatpush1.bf16.msra.mxu0 0
        %313 = vmatprep.subr.bf16.mxu0 0
        %314 = vmatpush1.bf16.msra.mxu0 0
        %315 = vmatprep.subr.bf16.mxu0 0
        %316 = vmatpush1.bf16.msra.mxu0 0
        %317 = vmatprep.subr.bf16.mxu0 0
        %318 = vmatpush1.bf16.msra.mxu0 0
        %319 = vmatprep.subr.bf16.mxu0 0
        %320 = vmatpush1.bf16.msra.mxu0 0
        %321 = vmatprep.subr.bf16.mxu0 0
        %322 = vmatpush1.bf16.msra.mxu0 0
        %323 = vmatprep.subr.bf16.mxu0 0
        %324 = vmatpush1.bf16.msra.mxu0 0
        %325 = vmatprep.mubr.bf16.mxu0 0
        %326 = vmatmul.mubr.bf16.gmra.mrb[0].mxu0 %v291
        %v327 = vpop.f32.mrb[0].mxu0
        %v328 = vadd.f32 %v287, %v327
        %v329 = vpop.f32.mrb[0].mxu0
        %v330 = vpop.f32.mrb[0].mxu0
        %v331 = vadd.f32 %v287, %v330
        %v332 = vpop.f32.mrb[0].mxu0
        %333 = vdwg.mxu0
        %v334 = vmul.f32 %v328, 0.35355338
        %v335 = vmul.f32 %v331, 0.35355338
        %v336 = vpack.c.bf16 %v334, %v334
        %v337 = vpack.c.bf16 %v335, %v335
        %v338 = vpack.c.bf16 %v328, %v328
        %v339 = vpack.c.bf16 %v331, %v331
        %341 = vrot.lane.b32.xlu0 %v338, 96
        %v342 = vpop.permute.xlu0 %341
        %vm343 = vcmask 64512
        %v345 = vsel %vm343, %v336, 0
        %v348 = vsel %vm343, %v342, 0
        %350 = vmatprep.subr.bf16.mxu0 0
        %351 = vmatpush1.bf16.xpose.msra.mxu0 %v348
        %352 = vmatprep.subr.bf16.mxu0 0
        %353 = vmatpush1.bf16.xpose.msra.mxu0 0
        %354 = vmatprep.subr.bf16.mxu0 0
        %355 = vmatpush1.bf16.xpose.msra.mxu0 0
        %356 = vmatprep.subr.bf16.mxu0 0
        %357 = vmatpush1.bf16.xpose.msra.mxu0 0
        %358 = vmatprep.subr.bf16.mxu0 0
        %359 = vmatpush1.bf16.xpose.msra.mxu0 0
        %360 = vmatprep.subr.bf16.mxu0 0
        %361 = vmatpush1.bf16.xpose.msra.mxu0 0
        %362 = vmatprep.subr.bf16.mxu0 0
        %363 = vmatpush1.bf16.xpose.msra.mxu0 0
        %364 = vmatprep.subr.bf16.mxu0 0
        %365 = vmatpush1.bf16.xpose.msra.mxu0 0
        %366 = vmatprep.subr.bf16.mxu0 0
        %367 = vmatpush1.bf16.xpose.msra.mxu0 0
        %368 = vmatprep.subr.bf16.mxu0 0
        %369 = vmatpush1.bf16.xpose.msra.mxu0 0
        %370 = vmatprep.subr.bf16.mxu0 0
        %371 = vmatpush1.bf16.xpose.msra.mxu0 0
        %372 = vmatprep.subr.bf16.mxu0 0
        %373 = vmatpush1.bf16.xpose.msra.mxu0 0
        %374 = vmatprep.subr.bf16.mxu0 0
        %375 = vmatpush1.bf16.xpose.msra.mxu0 0
        %376 = vmatprep.subr.bf16.mxu0 0
        %377 = vmatpush1.bf16.xpose.msra.mxu0 0
        %378 = vmatprep.subr.bf16.mxu0 0
        %379 = vmatpush1.bf16.xpose.msra.mxu0 0
        %380 = vmatprep.subr.bf16.mxu0 0
        %381 = vmatpush1.bf16.xpose.msra.mxu0 0
        %382 = vmatprep.mubr.bf16.mxu0 0
        %383 = vmatmul.mubr.bf16.gmra.mrb[0].mxu0 %v345
        %v384 = vpop.f32.mrb[0].mxu0
        %v385 = vadd.f32 0.0, %v384
        %v386 = vpop.f32.mrb[0].mxu0
        %v387 = vpop.f32.mrb[0].mxu0
        %v388 = vpop.f32.mrb[0].mxu0
        %389 = vdwg.mxu0
        %391 = vrot.lane.b32.xlu0 %v339, 96
        %v392 = vpop.permute.xlu0 %391
        %v394 = vsel %vm343, %v337, 0
        %v397 = vsel %vm343, %v392, 0
        %399 = vmatprep.subr.bf16.mxu0 0
        %400 = vmatpush1.bf16.xpose.msra.mxu0 %v397
        %401 = vmatprep.subr.bf16.mxu0 0
        %402 = vmatpush1.bf16.xpose.msra.mxu0 0
        %403 = vmatprep.subr.bf16.mxu0 0
        %404 = vmatpush1.bf16.xpose.msra.mxu0 0
        %405 = vmatprep.subr.bf16.mxu0 0
        %406 = vmatpush1.bf16.xpose.msra.mxu0 0
        %407 = vmatprep.subr.bf16.mxu0 0
        %408 = vmatpush1.bf16.xpose.msra.mxu0 0
        %409 = vmatprep.subr.bf16.mxu0 0
        %410 = vmatpush1.bf16.xpose.msra.mxu0 0
        %411 = vmatprep.subr.bf16.mxu0 0
        %412 = vmatpush1.bf16.xpose.msra.mxu0 0
        %413 = vmatprep.subr.bf16.mxu0 0
        %414 = vmatpush1.bf16.xpose.msra.mxu0 0
        %415 = vmatprep.subr.bf16.mxu0 0
        %416 = vmatpush1.bf16.xpose.msra.mxu0 0
        %417 = vmatprep.subr.bf16.mxu0 0
        %418 = vmatpush1.bf16.xpose.msra.mxu0 0
        %419 = vmatprep.subr.bf16.mxu0 0
        %420 = vmatpush1.bf16.xpose.msra.mxu0 0
        %421 = vmatprep.subr.bf16.mxu0 0
        %422 = vmatpush1.bf16.xpose.msra.mxu0 0
        %423 = vmatprep.subr.bf16.mxu0 0
        %424 = vmatpush1.bf16.xpose.msra.mxu0 0
        %425 = vmatprep.subr.bf16.mxu0 0
        %426 = vmatpush1.bf16.xpose.msra.mxu0 0
        %427 = vmatprep.subr.bf16.mxu0 0
        %428 = vmatpush1.bf16.xpose.msra.mxu0 0
        %429 = vmatprep.subr.bf16.mxu0 0
        %430 = vmatpush1.bf16.xpose.msra.mxu0 0
        %431 = vmatprep.mubr.bf16.mxu0 0
        %432 = vmatmul.mubr.bf16.gmra.mrb[0].mxu0 %v394
        %v433 = vpop.f32.mrb[0].mxu0
        %v434 = vadd.f32 0.0, %v433
        %v435 = vpop.f32.mrb[0].mxu0
        %v436 = vpop.f32.mrb[0].mxu0
        %v437 = vpop.f32.mrb[0].mxu0
        %438 = vdwg.mxu0
        %v439 = vsel %vm343, %v385, -inf
        %440 = vmax.xlane.f32.xlu0 %v439
        %v441 = vpop.xlane.xlu0 %440
        %v442 = vsel %vm343, %v434, -inf
        %443 = vmax.xlane.f32.xlu0 %v442
        %v444 = vpop.xlane.xlu0 %443
        %v445 = vsub.f32 %v385, %v441
        %v446 = vsub.f32 %v434, %v444
        %v447 = vmul.f32 %v445, 1.442695
        %v448 = vpow.pop %v447
        %v449 = vmul.f32 %v446, 1.442695
        %v450 = vpow.pop %v449
        %v451 = vsel %vm343, %v448, 0.0
        %452 = vadd.xlane.f32.xlu0 %v451
        %v453 = vpop.xlane.xlu0 %452
        %v454 = vsel %vm343, %v450, 0.0
        %455 = vadd.xlane.f32.xlu0 %v454
        %v456 = vpop.xlane.xlu0 %455
        %v457 = vrcp.pop %v453
        %v458 = vrcp.pop %v456
        %v459 = vmul.f32 %v448, %v457
        %v460 = vmul.f32 %v450, %v458
        %v461 = vpack.c.bf16 %v459, %v459
        %v462 = vpack.c.bf16 %v460, %v460
        %463 = vrot.lane.b32.xlu0 %v338, 64
        %v464 = vpop.permute.xlu0 %463
        %v466 = vsel %vm343, %v461, 0
        %vm468 = vcmask 1043456
        %v470 = vsel %vm468, %v464, 0
        %472 = vmatprep.subr.bf16.mxu0 0
        %473 = vmatpush1.bf16.msra.mxu0 %v470
        %474 = vmatprep.subr.bf16.mxu0 0
        %475 = vmatpush1.bf16.msra.mxu0 0
        %476 = vmatprep.subr.bf16.mxu0 0
        %477 = vmatpush1.bf16.msra.mxu0 0
        %478 = vmatprep.subr.bf16.mxu0 0
        %479 = vmatpush1.bf16.msra.mxu0 0
        %480 = vmatprep.subr.bf16.mxu0 0
        %481 = vmatpush1.bf16.msra.mxu0 0
        %482 = vmatprep.subr.bf16.mxu0 0
        %483 = vmatpush1.bf16.msra.mxu0 0
        %484 = vmatprep.subr.bf16.mxu0 0
        %485 = vmatpush1.bf16.msra.mxu0 0
        %486 = vmatprep.subr.bf16.mxu0 0
        %487 = vmatpush1.bf16.msra.mxu0 0
        %488 = vmatprep.subr.bf16.mxu0 0
        %489 = vmatpush1.bf16.msra.mxu0 0
        %490 = vmatprep.subr.bf16.mxu0 0
        %491 = vmatpush1.bf16.msra.mxu0 0
        %492 = vmatprep.subr.bf16.mxu0 0
        %493 = vmatpush1.bf16.msra.mxu0 0
        %494 = vmatprep.subr.bf16.mxu0 0
        %495 = vmatpush1.bf16.msra.mxu0 0
        %496 = vmatprep.subr.bf16.mxu0 0
        %497 = vmatpush1.bf16.msra.mxu0 0
        %498 = vmatprep.subr.bf16.mxu0 0
        %499 = vmatpush1.bf16.msra.mxu0 0
        %500 = vmatprep.subr.bf16.mxu0 0
        %501 = vmatpush1.bf16.msra.mxu0 0
        %502 = vmatprep.subr.bf16.mxu0 0
        %503 = vmatpush1.bf16.msra.mxu0 0
        %504 = vmatprep.mubr.bf16.mxu0 0
        %505 = vmatmul.mubr.bf16.gmra.mrb[0].mxu0 %v466
        %v506 = vpop.f32.mrb[0].mxu0
        %v507 = vadd.f32 0.0, %v506
        %v508 = vpop.f32.mrb[0].mxu0
        %v509 = vpop.f32.mrb[0].mxu0
        %v510 = vpop.f32.mrb[0].mxu0
        %511 = vdwg.mxu0
        %512 = vrot.lane.b32.xlu0 %v339, 64
        %v513 = vpop.permute.xlu0 %512
        %v515 = vsel %vm343, %v462, 0
        %v518 = vsel %vm468, %v513, 0
        %520 = vmatprep.subr.bf16.mxu0 0
        %521 = vmatpush1.bf16.msra.mxu0 %v518
        %522 = vmatprep.subr.bf16.mxu0 0
        %523 = vmatpush1.bf16.msra.mxu0 0
        %524 = vmatprep.subr.bf16.mxu0 0
        %525 = vmatpush1.bf16.msra.mxu0 0
        %526 = vmatprep.subr.bf16.mxu0 0
        %527 = vmatpush1.bf16.msra.mxu0 0
        %528 = vmatprep.subr.bf16.mxu0 0
        %529 = vmatpush1.bf16.msra.mxu0 0
        %530 = vmatprep.subr.bf16.mxu0 0
        %531 = vmatpush1.bf16.msra.mxu0 0
        %532 = vmatprep.subr.bf16.mxu0 0
        %533 = vmatpush1.bf16.msra.mxu0 0
        %534 = vmatprep.subr.bf16.mxu0 0
        %535 = vmatpush1.bf16.msra.mxu0 0
        %536 = vmatprep.subr.bf16.mxu0 0
        %537 = vmatpush1.bf16.msra.mxu0 0
        %538 = vmatprep.subr.bf16.mxu0 0
        %539 = vmatpush1.bf16.msra.mxu0 0
        %540 = vmatprep.subr.bf16.mxu0 0
        %541 = vmatpush1.bf16.msra.mxu0 0
        %542 = vmatprep.subr.bf16.mxu0 0
        %543 = vmatpush1.bf16.msra.mxu0 0
        %544 = vmatprep.subr.bf16.mxu0 0
        %545 = vmatpush1.bf16.msra.mxu0 0
        %546 = vmatprep.subr.bf16.mxu0 0
        %547 = vmatpush1.bf16.msra.mxu0 0
        %548 = vmatprep.subr.bf16.mxu0 0
        %549 = vmatpush1.bf16.msra.mxu0 0
        %550 = vmatprep.subr.bf16.mxu0 0
        %551 = vmatpush1.bf16.msra.mxu0 0
        %552 = vmatprep.mubr.bf16.mxu0 0
        %553 = vmatmul.mubr.bf16.gmra.mrb[0].mxu0 %v515
        %v554 = vpop.f32.mrb[0].mxu0
        %v555 = vadd.f32 0.0, %v554
        %v556 = vpop.f32.mrb[0].mxu0
        %v557 = vpop.f32.mrb[0].mxu0
        %v558 = vpop.f32.mrb[0].mxu0
        %559 = vdwg.mxu0
        %561 = vrot.lane.b32.xlu0 %v336, 120
        %v562 = vpop.permute.xlu0 %561
        %563 = vrot.lane.b32.xlu0 %v338, 88
        %v564 = vpop.permute.xlu0 %563
        %v566 = vsel %vm343, %v562, 0
        %v569 = vsel %vm343, %v564, 0
        %571 = vmatprep.subr.bf16.mxu0 0
        %572 = vmatpush1.bf16.xpose.msra.mxu0 %v569
        %573 = vmatprep.subr.bf16.mxu0 0
        %574 = vmatpush1.bf16.xpose.msra.mxu0 0
        %575 = vmatprep.subr.bf16.mxu0 0
        %576 = vmatpush1.bf16.xpose.msra.mxu0 0
        %577 = vmatprep.subr.bf16.mxu0 0
        %578 = vmatpush1.bf16.xpose.msra.mxu0 0
        %579 = vmatprep.subr.bf16.mxu0 0
        %580 = vmatpush1.bf16.xpose.msra.mxu0 0
        %581 = vmatprep.subr.bf16.mxu0 0
        %582 = vmatpush1.bf16.xpose.msra.mxu0 0
        %583 = vmatprep.subr.bf16.mxu0 0
        %584 = vmatpush1.bf16.xpose.msra.mxu0 0
        %585 = vmatprep.subr.bf16.mxu0 0
        %586 = vmatpush1.bf16.xpose.msra.mxu0 0
        %587 = vmatprep.subr.bf16.mxu0 0
        %588 = vmatpush1.bf16.xpose.msra.mxu0 0
        %589 = vmatprep.subr.bf16.mxu0 0
        %590 = vmatpush1.bf16.xpose.msra.mxu0 0
        %591 = vmatprep.subr.bf16.mxu0 0
        %592 = vmatpush1.bf16.xpose.msra.mxu0 0
        %593 = vmatprep.subr.bf16.mxu0 0
        %594 = vmatpush1.bf16.xpose.msra.mxu0 0
        %595 = vmatprep.subr.bf16.mxu0 0
        %596 = vmatpush1.bf16.xpose.msra.mxu0 0
        %597 = vmatprep.subr.bf16.mxu0 0
        %598 = vmatpush1.bf16.xpose.msra.mxu0 0
        %599 = vmatprep.subr.bf16.mxu0 0
        %600 = vmatpush1.bf16.xpose.msra.mxu0 0
        %601 = vmatprep.subr.bf16.mxu0 0
        %602 = vmatpush1.bf16.xpose.msra.mxu0 0
        %603 = vmatprep.mubr.bf16.mxu0 0
        %604 = vmatmul.mubr.bf16.gmra.mrb[0].mxu0 %v566
        %v605 = vpop.f32.mrb[0].mxu0
        %v606 = vadd.f32 0.0, %v605
        %v607 = vpop.f32.mrb[0].mxu0
        %v608 = vpop.f32.mrb[0].mxu0
        %v609 = vpop.f32.mrb[0].mxu0
        %610 = vdwg.mxu0
        %612 = vrot.lane.b32.xlu0 %v337, 120
        %v613 = vpop.permute.xlu0 %612
        %614 = vrot.lane.b32.xlu0 %v339, 88
        %v615 = vpop.permute.xlu0 %614
        %v617 = vsel %vm343, %v613, 0
        %v620 = vsel %vm343, %v615, 0
        %622 = vmatprep.subr.bf16.mxu0 0
        %623 = vmatpush1.bf16.xpose.msra.mxu0 %v620
        %624 = vmatprep.subr.bf16.mxu0 0
        %625 = vmatpush1.bf16.xpose.msra.mxu0 0
        %626 = vmatprep.subr.bf16.mxu0 0
        %627 = vmatpush1.bf16.xpose.msra.mxu0 0
        %628 = vmatprep.subr.bf16.mxu0 0
        %629 = vmatpush1.bf16.xpose.msra.mxu0 0
        %630 = vmatprep.subr.bf16.mxu0 0
        %631 = vmatpush1.bf16.xpose.msra.mxu0 0
        %632 = vmatprep.subr.bf16.mxu0 0
        %633 = vmatpush1.bf16.xpose.msra.mxu0 0
        %634 = vmatprep.subr.bf16.mxu0 0
        %635 = vmatpush1.bf16.xpose.msra.mxu0 0
        %636 = vmatprep.subr.bf16.mxu0 0
        %637 = vmatpush1.bf16.xpose.msra.mxu0 0
        %638 = vmatprep.subr.bf16.mxu0 0
        %639 = vmatpush1.bf16.xpose.msra.mxu0 0
        %640 = vmatprep.subr.bf16.mxu0 0
        %641 = vmatpush1.bf16.xpose.msra.mxu0 0
        %642 = vmatprep.subr.bf16.mxu0 0
        %643 = vmatpush1.bf16.xpose.msra.mxu0 0
        %644 = vmatprep.subr.bf16.mxu0 0
        %645 = vmatpush1.bf16.xpose.msra.mxu0 0
        %646 = vmatprep.subr.bf16.mxu0 0
        %647 = vmatpush1.bf16.xpose.msra.mxu0 0
        %648 = vmatprep.subr.bf16.mxu0 0
        %649 = vmatpush1.bf16.xpose.msra.mxu0 0
        %650 = vmatprep.subr.bf16.mxu0 0
        %651 = vmatpush1.bf16.xpose.msra.mxu0 0
        %652 = vmatprep.subr.bf16.mxu0 0
        %653 = vmatpush1.bf16.xpose.msra.mxu0 0
        %654 = vmatprep.mubr.bf16.mxu0 0
        %655 = vmatmul.mubr.bf16.gmra.mrb[0].mxu0 %v617
        %v656 = vpop.f32.mrb[0].mxu0
        %v657 = vadd.f32 0.0, %v656
        %v658 = vpop.f32.mrb[0].mxu0
        %v659 = vpop.f32.mrb[0].mxu0
        %v660 = vpop.f32.mrb[0].mxu0
        %661 = vdwg.mxu0
        %v662 = vsel %vm343, %v606, -inf
        %663 = vmax.xlane.f32.xlu0 %v662
        %v664 = vpop.xlane.xlu0 %663
        %v665 = vsel %vm343, %v657, -inf
        %666 = vmax.xlane.f32.xlu0 %v665
        %v667 = vpop.xlane.xlu0 %666
        %v668 = vsub.f32 %v606, %v664
        %v669 = vsub.f32 %v657, %v667
        %v670 = vmul.f32 %v668, 1.442695
        %v671 = vpow.pop %v670
        %v672 = vmul.f32 %v669, 1.442695
        %v673 = vpow.pop %v672
        %v674 = vsel %vm343, %v671, 0.0
        %675 = vadd.xlane.f32.xlu0 %v674
        %v676 = vpop.xlane.xlu0 %675
        %v677 = vsel %vm343, %v673, 0.0
        %678 = vadd.xlane.f32.xlu0 %v677
        %v679 = vpop.xlane.xlu0 %678
        %v680 = vrcp.pop %v676
        %v681 = vrcp.pop %v679
        %v682 = vmul.f32 %v671, %v680
        %v683 = vmul.f32 %v673, %v681
        %v684 = vpack.c.bf16 %v682, %v682
        %v685 = vpack.c.bf16 %v683, %v683
        %686 = vrot.lane.b32.xlu0 %v338, 56
        %v687 = vpop.permute.xlu0 %686
        %v689 = vsel %vm343, %v684, 0
        %v692 = vsel %vm468, %v687, 0
        %694 = vmatprep.subr.bf16.mxu0 0
        %695 = vmatpush1.bf16.msra.mxu0 %v692
        %696 = vmatprep.subr.bf16.mxu0 0
        %697 = vmatpush1.bf16.msra.mxu0 0
        %698 = vmatprep.subr.bf16.mxu0 0
        %699 = vmatpush1.bf16.msra.mxu0 0
        %700 = vmatprep.subr.bf16.mxu0 0
        %701 = vmatpush1.bf16.msra.mxu0 0
        %702 = vmatprep.subr.bf16.mxu0 0
        %703 = vmatpush1.bf16.msra.mxu0 0
        %704 = vmatprep.subr.bf16.mxu0 0
        %705 = vmatpush1.bf16.msra.mxu0 0
        %706 = vmatprep.subr.bf16.mxu0 0
        %707 = vmatpush1.bf16.msra.mxu0 0
        %708 = vmatprep.subr.bf16.mxu0 0
        %709 = vmatpush1.bf16.msra.mxu0 0
        %710 = vmatprep.subr.bf16.mxu0 0
        %711 = vmatpush1.bf16.msra.mxu0 0
        %712 = vmatprep.subr.bf16.mxu0 0
        %713 = vmatpush1.bf16.msra.mxu0 0
        %714 = vmatprep.subr.bf16.mxu0 0
        %715 = vmatpush1.bf16.msra.mxu0 0
        %716 = vmatprep.subr.bf16.mxu0 0
        %717 = vmatpush1.bf16.msra.mxu0 0
        %718 = vmatprep.subr.bf16.mxu0 0
        %719 = vmatpush1.bf16.msra.mxu0 0
        %720 = vmatprep.subr.bf16.mxu0 0
        %721 = vmatpush1.bf16.msra.mxu0 0
        %722 = vmatprep.subr.bf16.mxu0 0
        %723 = vmatpush1.bf16.msra.mxu0 0
        %724 = vmatprep.subr.bf16.mxu0 0
        %725 = vmatpush1.bf16.msra.mxu0 0
        %726 = vmatprep.mubr.bf16.mxu0 0
        %727 = vmatmul.mubr.bf16.gmra.mrb[0].mxu0 %v689
        %v728 = vpop.f32.mrb[0].mxu0
        %v729 = vadd.f32 0.0, %v728
        %v730 = vpop.f32.mrb[0].mxu0
        %v731 = vpop.f32.mrb[0].mxu0
        %v732 = vpop.f32.mrb[0].mxu0
        %733 = vdwg.mxu0
        %734 = vrot.lane.b32.xlu0 %v339, 56
        %v735 = vpop.permute.xlu0 %734
        %v737 = vsel %vm343, %v685, 0
        %v740 = vsel %vm468, %v735, 0
        %742 = vmatprep.subr.bf16.mxu0 0
        %743 = vmatpush1.bf16.msra.mxu0 %v740
        %744 = vmatprep.subr.bf16.mxu0 0
        %745 = vmatpush1.bf16.msra.mxu0 0
        %746 = vmatprep.subr.bf16.mxu0 0
        %747 = vmatpush1.bf16.msra.mxu0 0
        %748 = vmatprep.subr.bf16.mxu0 0
        %749 = vmatpush1.bf16.msra.mxu0 0
        %750 = vmatprep.subr.bf16.mxu0 0
        %751 = vmatpush1.bf16.msra.mxu0 0
        %752 = vmatprep.subr.bf16.mxu0 0
        %753 = vmatpush1.bf16.msra.mxu0 0
        %754 = vmatprep.subr.bf16.mxu0 0
        %755 = vmatpush1.bf16.msra.mxu0 0
        %756 = vmatprep.subr.bf16.mxu0 0
        %757 = vmatpush1.bf16.msra.mxu0 0
        %758 = vmatprep.subr.bf16.mxu0 0
        %759 = vmatpush1.bf16.msra.mxu0 0
        %760 = vmatprep.subr.bf16.mxu0 0
        %761 = vmatpush1.bf16.msra.mxu0 0
        %762 = vmatprep.subr.bf16.mxu0 0
        %763 = vmatpush1.bf16.msra.mxu0 0
        %764 = vmatprep.subr.bf16.mxu0 0
        %765 = vmatpush1.bf16.msra.mxu0 0
        %766 = vmatprep.subr.bf16.mxu0 0
        %767 = vmatpush1.bf16.msra.mxu0 0
        %768 = vmatprep.subr.bf16.mxu0 0
        %769 = vmatpush1.bf16.msra.mxu0 0
        %770 = vmatprep.subr.bf16.mxu0 0
        %771 = vmatpush1.bf16.msra.mxu0 0
        %772 = vmatprep.subr.bf16.mxu0 0
        %773 = vmatpush1.bf16.msra.mxu0 0
        %774 = vmatprep.mubr.bf16.mxu0 0
        %775 = vmatmul.mubr.bf16.gmra.mrb[0].mxu0 %v737
        %v776 = vpop.f32.mrb[0].mxu0
        %v777 = vadd.f32 0.0, %v776
        %v778 = vpop.f32.mrb[0].mxu0
        %v779 = vpop.f32.mrb[0].mxu0
        %v780 = vpop.f32.mrb[0].mxu0
        %781 = vdwg.mxu0
        %782 = vrot.lane.b32.xlu0 %v336, 112
        %v783 = vpop.permute.xlu0 %782
        %784 = vrot.lane.b32.xlu0 %v338, 80
        %v785 = vpop.permute.xlu0 %784
        %v787 = vsel %vm343, %v783, 0
        %v790 = vsel %vm343, %v785, 0
        %792 = vmatprep.subr.bf16.mxu0 0
        %793 = vmatpush1.bf16.xpose.msra.mxu0 %v790
        %794 = vmatprep.subr.bf16.mxu0 0
        %795 = vmatpush1.bf16.xpose.msra.mxu0 0
        %796 = vmatprep.subr.bf16.mxu0 0
        %797 = vmatpush1.bf16.xpose.msra.mxu0 0
        %798 = vmatprep.subr.bf16.mxu0 0
        %799 = vmatpush1.bf16.xpose.msra.mxu0 0
        %800 = vmatprep.subr.bf16.mxu0 0
        %801 = vmatpush1.bf16.xpose.msra.mxu0 0
        %802 = vmatprep.subr.bf16.mxu0 0
        %803 = vmatpush1.bf16.xpose.msra.mxu0 0
        %804 = vmatprep.subr.bf16.mxu0 0
        %805 = vmatpush1.bf16.xpose.msra.mxu0 0
        %806 = vmatprep.subr.bf16.mxu0 0
        %807 = vmatpush1.bf16.xpose.msra.mxu0 0
        %808 = vmatprep.subr.bf16.mxu0 0
        %809 = vmatpush1.bf16.xpose.msra.mxu0 0
        %810 = vmatprep.subr.bf16.mxu0 0
        %811 = vmatpush1.bf16.xpose.msra.mxu0 0
        %812 = vmatprep.subr.bf16.mxu0 0
        %813 = vmatpush1.bf16.xpose.msra.mxu0 0
        %814 = vmatprep.subr.bf16.mxu0 0
        %815 = vmatpush1.bf16.xpose.msra.mxu0 0
        %816 = vmatprep.subr.bf16.mxu0 0
        %817 = vmatpush1.bf16.xpose.msra.mxu0 0
        %818 = vmatprep.subr.bf16.mxu0 0
        %819 = vmatpush1.bf16.xpose.msra.mxu0 0
        %820 = vmatprep.subr.bf16.mxu0 0
        %821 = vmatpush1.bf16.xpose.msra.mxu0 0
        %822 = vmatprep.subr.bf16.mxu0 0
        %823 = vmatpush1.bf16.xpose.msra.mxu0 0
        %824 = vmatprep.mubr.bf16.mxu0 0
        %825 = vmatmul.mubr.bf16.gmra.mrb[0].mxu0 %v787
        %v826 = vpop.f32.mrb[0].mxu0
        %v827 = vadd.f32 0.0, %v826
        %v828 = vpop.f32.mrb[0].mxu0
        %v829 = vpop.f32.mrb[0].mxu0
        %v830 = vpop.f32.mrb[0].mxu0
        %831 = vdwg.mxu0
        %832 = vrot.lane.b32.xlu0 %v337, 112
        %v833 = vpop.permute.xlu0 %832
        %834 = vrot.lane.b32.xlu0 %v339, 80
        %v835 = vpop.permute.xlu0 %834
        %v837 = vsel %vm343, %v833, 0
        %v840 = vsel %vm343, %v835, 0
        %842 = vmatprep.subr.bf16.mxu0 0
        %843 = vmatpush1.bf16.xpose.msra.mxu0 %v840
        %844 = vmatprep.subr.bf16.mxu0 0
        %845 = vmatpush1.bf16.xpose.msra.mxu0 0
        %846 = vmatprep.subr.bf16.mxu0 0
        %847 = vmatpush1.bf16.xpose.msra.mxu0 0
        %848 = vmatprep.subr.bf16.mxu0 0
        %849 = vmatpush1.bf16.xpose.msra.mxu0 0
        %850 = vmatprep.subr.bf16.mxu0 0
        %851 = vmatpush1.bf16.xpose.msra.mxu0 0
        %852 = vmatprep.subr.bf16.mxu0 0
        %853 = vmatpush1.bf16.xpose.msra.mxu0 0
        %854 = vmatprep.subr.bf16.mxu0 0
        %855 = vmatpush1.bf16.xpose.msra.mxu0 0
        %856 = vmatprep.subr.bf16.mxu0 0
        %857 = vmatpush1.bf16.xpose.msra.mxu0 0
        %858 = vmatprep.subr.bf16.mxu0 0
        %859 = vmatpush1.bf16.xpose.msra.mxu0 0
        %860 = vmatprep.subr.bf16.mxu0 0
        %861 = vmatpush1.bf16.xpose.msra.mxu0 0
        %862 = vmatprep.subr.bf16.mxu0 0
        %863 = vmatpush1.bf16.xpose.msra.mxu0 0
        %864 = vmatprep.subr.bf16.mxu0 0
        %865 = vmatpush1.bf16.xpose.msra.mxu0 0
        %866 = vmatprep.subr.bf16.mxu0 0
        %867 = vmatpush1.bf16.xpose.msra.mxu0 0
        %868 = vmatprep.subr.bf16.mxu0 0
        %869 = vmatpush1.bf16.xpose.msra.mxu0 0
        %870 = vmatprep.subr.bf16.mxu0 0
        %871 = vmatpush1.bf16.xpose.msra.mxu0 0
        %872 = vmatprep.subr.bf16.mxu0 0
        %873 = vmatpush1.bf16.xpose.msra.mxu0 0
        %874 = vmatprep.mubr.bf16.mxu0 0
        %875 = vmatmul.mubr.bf16.gmra.mrb[0].mxu0 %v837
        %v876 = vpop.f32.mrb[0].mxu0
        %v877 = vadd.f32 0.0, %v876
        %v878 = vpop.f32.mrb[0].mxu0
        %v879 = vpop.f32.mrb[0].mxu0
        %v880 = vpop.f32.mrb[0].mxu0
        %881 = vdwg.mxu0
        %v882 = vsel %vm343, %v827, -inf
        %883 = vmax.xlane.f32.xlu0 %v882
        %v884 = vpop.xlane.xlu0 %883
        %v885 = vsel %vm343, %v877, -inf
        %886 = vmax.xlane.f32.xlu0 %v885
        %v887 = vpop.xlane.xlu0 %886
        %v888 = vsub.f32 %v827, %v884
        %v889 = vsub.f32 %v877, %v887
        %v890 = vmul.f32 %v888, 1.442695
        %v891 = vpow.pop %v890
        %v892 = vmul.f32 %v889, 1.442695
        %v893 = vpow.pop %v892
        %v894 = vsel %vm343, %v891, 0.0
        %895 = vadd.xlane.f32.xlu0 %v894
        %v896 = vpop.xlane.xlu0 %895
        %v897 = vsel %vm343, %v893, 0.0
        %898 = vadd.xlane.f32.xlu0 %v897
        %v899 = vpop.xlane.xlu0 %898
        %v900 = vrcp.pop %v896
        %v901 = vrcp.pop %v899
        %v902 = vmul.f32 %v891, %v900
        %v903 = vmul.f32 %v893, %v901
        %v904 = vpack.c.bf16 %v902, %v902
        %v905 = vpack.c.bf16 %v903, %v903
        %906 = vrot.lane.b32.xlu0 %v338, 48
        %v907 = vpop.permute.xlu0 %906
        %v909 = vsel %vm343, %v904, 0
        %v912 = vsel %vm468, %v907, 0
        %914 = vmatprep.subr.bf16.mxu0 0
        %915 = vmatpush1.bf16.msra.mxu0 %v912
        %916 = vmatprep.subr.bf16.mxu0 0
        %917 = vmatpush1.bf16.msra.mxu0 0
        %918 = vmatprep.subr.bf16.mxu0 0
        %919 = vmatpush1.bf16.msra.mxu0 0
        %920 = vmatprep.subr.bf16.mxu0 0
        %921 = vmatpush1.bf16.msra.mxu0 0
        %922 = vmatprep.subr.bf16.mxu0 0
        %923 = vmatpush1.bf16.msra.mxu0 0
        %924 = vmatprep.subr.bf16.mxu0 0
        %925 = vmatpush1.bf16.msra.mxu0 0
        %926 = vmatprep.subr.bf16.mxu0 0
        %927 = vmatpush1.bf16.msra.mxu0 0
        %928 = vmatprep.subr.bf16.mxu0 0
        %929 = vmatpush1.bf16.msra.mxu0 0
        %930 = vmatprep.subr.bf16.mxu0 0
        %931 = vmatpush1.bf16.msra.mxu0 0
        %932 = vmatprep.subr.bf16.mxu0 0
        %933 = vmatpush1.bf16.msra.mxu0 0
        %934 = vmatprep.subr.bf16.mxu0 0
        %935 = vmatpush1.bf16.msra.mxu0 0
        %936 = vmatprep.subr.bf16.mxu0 0
        %937 = vmatpush1.bf16.msra.mxu0 0
        %938 = vmatprep.subr.bf16.mxu0 0
        %939 = vmatpush1.bf16.msra.mxu0 0
        %940 = vmatprep.subr.bf16.mxu0 0
        %941 = vmatpush1.bf16.msra.mxu0 0
        %942 = vmatprep.subr.bf16.mxu0 0
        %943 = vmatpush1.bf16.msra.mxu0 0
        %944 = vmatprep.subr.bf16.mxu0 0
        %945 = vmatpush1.bf16.msra.mxu0 0
        %946 = vmatprep.mubr.bf16.mxu0 0
        %947 = vmatmul.mubr.bf16.gmra.mrb[0].mxu0 %v909
        %v948 = vpop.f32.mrb[0].mxu0
        %v949 = vadd.f32 0.0, %v948
        %v950 = vpop.f32.mrb[0].mxu0
        %v951 = vpop.f32.mrb[0].mxu0
        %v952 = vpop.f32.mrb[0].mxu0
        %953 = vdwg.mxu0
        %954 = vrot.lane.b32.xlu0 %v339, 48
        %v955 = vpop.permute.xlu0 %954
        %v957 = vsel %vm343, %v905, 0
        %v960 = vsel %vm468, %v955, 0
        %962 = vmatprep.subr.bf16.mxu0 0
        %963 = vmatpush1.bf16.msra.mxu0 %v960
        %964 = vmatprep.subr.bf16.mxu0 0
        %965 = vmatpush1.bf16.msra.mxu0 0
        %966 = vmatprep.subr.bf16.mxu0 0
        %967 = vmatpush1.bf16.msra.mxu0 0
        %968 = vmatprep.subr.bf16.mxu0 0
        %969 = vmatpush1.bf16.msra.mxu0 0
        %970 = vmatprep.subr.bf16.mxu0 0
        %971 = vmatpush1.bf16.msra.mxu0 0
        %972 = vmatprep.subr.bf16.mxu0 0
        %973 = vmatpush1.bf16.msra.mxu0 0
        %974 = vmatprep.subr.bf16.mxu0 0
        %975 = vmatpush1.bf16.msra.mxu0 0
        %976 = vmatprep.subr.bf16.mxu0 0
        %977 = vmatpush1.bf16.msra.mxu0 0
        %978 = vmatprep.subr.bf16.mxu0 0
        %979 = vmatpush1.bf16.msra.mxu0 0
        %980 = vmatprep.subr.bf16.mxu0 0
        %981 = vmatpush1.bf16.msra.mxu0 0
        %982 = vmatprep.subr.bf16.mxu0 0
        %983 = vmatpush1.bf16.msra.mxu0 0
        %984 = vmatprep.subr.bf16.mxu0 0
        %985 = vmatpush1.bf16.msra.mxu0 0
        %986 = vmatprep.subr.bf16.mxu0 0
        %987 = vmatpush1.bf16.msra.mxu0 0
        %988 = vmatprep.subr.bf16.mxu0 0
        %989 = vmatpush1.bf16.msra.mxu0 0
        %990 = vmatprep.subr.bf16.mxu0 0
        %991 = vmatpush1.bf16.msra.mxu0 0
        %992 = vmatprep.subr.bf16.mxu0 0
        %993 = vmatpush1.bf16.msra.mxu0 0
        %994 = vmatprep.mubr.bf16.mxu0 0
        %995 = vmatmul.mubr.bf16.gmra.mrb[0].mxu0 %v957
        %v996 = vpop.f32.mrb[0].mxu0
        %v997 = vadd.f32 0.0, %v996
        %v998 = vpop.f32.mrb[0].mxu0
        %v999 = vpop.f32.mrb[0].mxu0
        %v1000 = vpop.f32.mrb[0].mxu0
        %1001 = vdwg.mxu0
        %1002 = vrot.lane.b32.xlu0 %v336, 104
        %v1003 = vpop.permute.xlu0 %1002
        %1004 = vrot.lane.b32.xlu0 %v338, 72
        %v1005 = vpop.permute.xlu0 %1004
        %v1007 = vsel %vm343, %v1003, 0
        %v1010 = vsel %vm343, %v1005, 0
        %1012 = vmatprep.subr.bf16.mxu0 0
        %1013 = vmatpush1.bf16.xpose.msra.mxu0 %v1010
        %1014 = vmatprep.subr.bf16.mxu0 0
        %1015 = vmatpush1.bf16.xpose.msra.mxu0 0
        %1016 = vmatprep.subr.bf16.mxu0 0
        %1017 = vmatpush1.bf16.xpose.msra.mxu0 0
        %1018 = vmatprep.subr.bf16.mxu0 0
        %1019 = vmatpush1.bf16.xpose.msra.mxu0 0
        %1020 = vmatprep.subr.bf16.mxu0 0
        %1021 = vmatpush1.bf16.xpose.msra.mxu0 0
        %1022 = vmatprep.subr.bf16.mxu0 0
        %1023 = vmatpush1.bf16.xpose.msra.mxu0 0
        %1024 = vmatprep.subr.bf16.mxu0 0
        %1025 = vmatpush1.bf16.xpose.msra.mxu0 0
        %1026 = vmatprep.subr.bf16.mxu0 0
        %1027 = vmatpush1.bf16.xpose.msra.mxu0 0
        %1028 = vmatprep.subr.bf16.mxu0 0
        %1029 = vmatpush1.bf16.xpose.msra.mxu0 0
        %1030 = vmatprep.subr.bf16.mxu0 0
        %1031 = vmatpush1.bf16.xpose.msra.mxu0 0
        %1032 = vmatprep.subr.bf16.mxu0 0
        %1033 = vmatpush1.bf16.xpose.msra.mxu0 0
        %1034 = vmatprep.subr.bf16.mxu0 0
        %1035 = vmatpush1.bf16.xpose.msra.mxu0 0
        %1036 = vmatprep.subr.bf16.mxu0 0
        %1037 = vmatpush1.bf16.xpose.msra.mxu0 0
        %1038 = vmatprep.subr.bf16.mxu0 0
        %1039 = vmatpush1.bf16.xpose.msra.mxu0 0
        %1040 = vmatprep.subr.bf16.mxu0 0
        %1041 = vmatpush1.bf16.xpose.msra.mxu0 0
        %1042 = vmatprep.subr.bf16.mxu0 0
        %1043 = vmatpush1.bf16.xpose.msra.mxu0 0
        %1044 = vmatprep.mubr.bf16.mxu0 0
        %1045 = vmatmul.mubr.bf16.gmra.mrb[0].mxu0 %v1007
        %v1046 = vpop.f32.mrb[0].mxu0
        %v1047 = vadd.f32 0.0, %v1046
        %v1048 = vpop.f32.mrb[0].mxu0
        %v1049 = vpop.f32.mrb[0].mxu0
        %v1050 = vpop.f32.mrb[0].mxu0
        %1051 = vdwg.mxu0
        %1052 = vrot.lane.b32.xlu0 %v337, 104
        %v1053 = vpop.permute.xlu0 %1052
        %1054 = vrot.lane.b32.xlu0 %v339, 72
        %v1055 = vpop.permute.xlu0 %1054
        %v1057 = vsel %vm343, %v1053, 0
        %v1060 = vsel %vm343, %v1055, 0
        %1062 = vmatprep.subr.bf16.mxu0 0
        %1063 = vmatpush1.bf16.xpose.msra.mxu0 %v1060
        %1064 = vmatprep.subr.bf16.mxu0 0
        %1065 = vmatpush1.bf16.xpose.msra.mxu0 0
        %1066 = vmatprep.subr.bf16.mxu0 0
        %1067 = vmatpush1.bf16.xpose.msra.mxu0 0
        %1068 = vmatprep.subr.bf16.mxu0 0
        %1069 = vmatpush1.bf16.xpose.msra.mxu0 0
        %1070 = vmatprep.subr.bf16.mxu0 0
        %1071 = vmatpush1.bf16.xpose.msra.mxu0 0
        %1072 = vmatprep.subr.bf16.mxu0 0
        %1073 = vmatpush1.bf16.xpose.msra.mxu0 0
        %1074 = vmatprep.subr.bf16.mxu0 0
        %1075 = vmatpush1.bf16.xpose.msra.mxu0 0
        %1076 = vmatprep.subr.bf16.mxu0 0
        %1077 = vmatpush1.bf16.xpose.msra.mxu0 0
        %1078 = vmatprep.subr.bf16.mxu0 0
        %1079 = vmatpush1.bf16.xpose.msra.mxu0 0
        %1080 = vmatprep.subr.bf16.mxu0 0
        %1081 = vmatpush1.bf16.xpose.msra.mxu0 0
        %1082 = vmatprep.subr.bf16.mxu0 0
        %1083 = vmatpush1.bf16.xpose.msra.mxu0 0
        %1084 = vmatprep.subr.bf16.mxu0 0
        %1085 = vmatpush1.bf16.xpose.msra.mxu0 0
        %1086 = vmatprep.subr.bf16.mxu0 0
        %1087 = vmatpush1.bf16.xpose.msra.mxu0 0
        %1088 = vmatprep.subr.bf16.mxu0 0
        %1089 = vmatpush1.bf16.xpose.msra.mxu0 0
        %1090 = vmatprep.subr.bf16.mxu0 0
        %1091 = vmatpush1.bf16.xpose.msra.mxu0 0
        %1092 = vmatprep.subr.bf16.mxu0 0
        %1093 = vmatpush1.bf16.xpose.msra.mxu0 0
        %1094 = vmatprep.mubr.bf16.mxu0 0
        %1095 = vmatmul.mubr.bf16.gmra.mrb[0].mxu0 %v1057
        %v1096 = vpop.f32.mrb[0].mxu0
        %v1097 = vadd.f32 0.0, %v1096
        %v1098 = vpop.f32.mrb[0].mxu0
        %v1099 = vpop.f32.mrb[0].mxu0
        %v1100 = vpop.f32.mrb[0].mxu0
        %1101 = vdwg.mxu0
        %v1102 = vsel %vm343, %v1047, -inf
        %1103 = vmax.xlane.f32.xlu0 %v1102
        %v1104 = vpop.xlane.xlu0 %1103
        %v1105 = vsel %vm343, %v1097, -inf
        %1106 = vmax.xlane.f32.xlu0 %v1105
        %v1107 = vpop.xlane.xlu0 %1106
        %v1108 = vsub.f32 %v1047, %v1104
        %v1109 = vsub.f32 %v1097, %v1107
        %v1110 = vmul.f32 %v1108, 1.442695
        %v1111 = vpow.pop %v1110
        %v1112 = vmul.f32 %v1109, 1.442695
        %v1113 = vpow.pop %v1112
        %v1114 = vsel %vm343, %v1111, 0.0
        %1115 = vadd.xlane.f32.xlu0 %v1114
        %v1116 = vpop.xlane.xlu0 %1115
        %v1117 = vsel %vm343, %v1113, 0.0
        %1118 = vadd.xlane.f32.xlu0 %v1117
        %v1119 = vpop.xlane.xlu0 %1118
        %v1120 = vrcp.pop %v1116
        %v1121 = vrcp.pop %v1119
        %v1122 = vmul.f32 %v1111, %v1120
        %v1123 = vmul.f32 %v1113, %v1121
        %v1124 = vpack.c.bf16 %v1122, %v1122
        %v1125 = vpack.c.bf16 %v1123, %v1123
        %1126 = vrot.lane.b32.xlu0 %v338, 40
        %v1127 = vpop.permute.xlu0 %1126
        %v1129 = vsel %vm343, %v1124, 0
        %v1132 = vsel %vm468, %v1127, 0
        %1134 = vmatprep.subr.bf16.mxu0 0
        %1135 = vmatpush1.bf16.msra.mxu0 %v1132
        %1136 = vmatprep.subr.bf16.mxu0 0
        %1137 = vmatpush1.bf16.msra.mxu0 0
        %1138 = vmatprep.subr.bf16.mxu0 0
        %1139 = vmatpush1.bf16.msra.mxu0 0
        %1140 = vmatprep.subr.bf16.mxu0 0
        %1141 = vmatpush1.bf16.msra.mxu0 0
        %1142 = vmatprep.subr.bf16.mxu0 0
        %1143 = vmatpush1.bf16.msra.mxu0 0
        %1144 = vmatprep.subr.bf16.mxu0 0
        %1145 = vmatpush1.bf16.msra.mxu0 0
        %1146 = vmatprep.subr.bf16.mxu0 0
        %1147 = vmatpush1.bf16.msra.mxu0 0
        %1148 = vmatprep.subr.bf16.mxu0 0
        %1149 = vmatpush1.bf16.msra.mxu0 0
        %1150 = vmatprep.subr.bf16.mxu0 0
        %1151 = vmatpush1.bf16.msra.mxu0 0
        %1152 = vmatprep.subr.bf16.mxu0 0
        %1153 = vmatpush1.bf16.msra.mxu0 0
        %1154 = vmatprep.subr.bf16.mxu0 0
        %1155 = vmatpush1.bf16.msra.mxu0 0
        %1156 = vmatprep.subr.bf16.mxu0 0
        %1157 = vmatpush1.bf16.msra.mxu0 0
        %1158 = vmatprep.subr.bf16.mxu0 0
        %1159 = vmatpush1.bf16.msra.mxu0 0
        %1160 = vmatprep.subr.bf16.mxu0 0
        %1161 = vmatpush1.bf16.msra.mxu0 0
        %1162 = vmatprep.subr.bf16.mxu0 0
        %1163 = vmatpush1.bf16.msra.mxu0 0
        %1164 = vmatprep.subr.bf16.mxu0 0
        %1165 = vmatpush1.bf16.msra.mxu0 0
        %1166 = vmatprep.mubr.bf16.mxu0 0
        %1167 = vmatmul.mubr.bf16.gmra.mrb[0].mxu0 %v1129
        %v1168 = vpop.f32.mrb[0].mxu0
        %v1169 = vadd.f32 0.0, %v1168
        %v1170 = vpop.f32.mrb[0].mxu0
        %v1171 = vpop.f32.mrb[0].mxu0
        %v1172 = vpop.f32.mrb[0].mxu0
        %1173 = vdwg.mxu0
        %1174 = vrot.lane.b32.xlu0 %v339, 40
        %v1175 = vpop.permute.xlu0 %1174
        %v1177 = vsel %vm343, %v1125, 0
        %v1180 = vsel %vm468, %v1175, 0
        %1182 = vmatprep.subr.bf16.mxu0 0
        %1183 = vmatpush1.bf16.msra.mxu0 %v1180
        %1184 = vmatprep.subr.bf16.mxu0 0
        %1185 = vmatpush1.bf16.msra.mxu0 0
        %1186 = vmatprep.subr.bf16.mxu0 0
        %1187 = vmatpush1.bf16.msra.mxu0 0
        %1188 = vmatprep.subr.bf16.mxu0 0
        %1189 = vmatpush1.bf16.msra.mxu0 0
        %1190 = vmatprep.subr.bf16.mxu0 0
        %1191 = vmatpush1.bf16.msra.mxu0 0
        %1192 = vmatprep.subr.bf16.mxu0 0
        %1193 = vmatpush1.bf16.msra.mxu0 0
        %1194 = vmatprep.subr.bf16.mxu0 0
        %1195 = vmatpush1.bf16.msra.mxu0 0
        %1196 = vmatprep.subr.bf16.mxu0 0
        %1197 = vmatpush1.bf16.msra.mxu0 0
        %1198 = vmatprep.subr.bf16.mxu0 0
        %1199 = vmatpush1.bf16.msra.mxu0 0
        %1200 = vmatprep.subr.bf16.mxu0 0
        %1201 = vmatpush1.bf16.msra.mxu0 0
        %1202 = vmatprep.subr.bf16.mxu0 0
        %1203 = vmatpush1.bf16.msra.mxu0 0
        %1204 = vmatprep.subr.bf16.mxu0 0
        %1205 = vmatpush1.bf16.msra.mxu0 0
        %1206 = vmatprep.subr.bf16.mxu0 0
        %1207 = vmatpush1.bf16.msra.mxu0 0
        %1208 = vmatprep.subr.bf16.mxu0 0
        %1209 = vmatpush1.bf16.msra.mxu0 0
        %1210 = vmatprep.subr.bf16.mxu0 0
        %1211 = vmatpush1.bf16.msra.mxu0 0
        %1212 = vmatprep.subr.bf16.mxu0 0
        %1213 = vmatpush1.bf16.msra.mxu0 0
        %1214 = vmatprep.mubr.bf16.mxu0 0
        %1215 = vmatmul.mubr.bf16.gmra.mrb[0].mxu0 %v1177
        %v1216 = vpop.f32.mrb[0].mxu0
        %v1217 = vadd.f32 0.0, %v1216
        %v1218 = vpop.f32.mrb[0].mxu0
        %v1219 = vpop.f32.mrb[0].mxu0
        %v1220 = vpop.f32.mrb[0].mxu0
        %1221 = vdwg.mxu0
        %1224 = vrot.lane.b32.xlu0 %v729, 8
        %v1225 = vpop.permute.xlu0 %1224
        %1226 = vrot.lane.b32.xlu0 %v777, 8
        %v1227 = vpop.permute.xlu0 %1226
        %1232 = vrot.lane.b32.xlu0 %v949, 16
        %v1233 = vpop.permute.xlu0 %1232
        %1234 = vrot.lane.b32.xlu0 %v997, 16
        %v1235 = vpop.permute.xlu0 %1234
        %1240 = vrot.lane.b32.xlu0 %v1169, 24
        %v1241 = vpop.permute.xlu0 %1240
        %1242 = vrot.lane.b32.xlu0 %v1217, 24
        %v1243 = vpop.permute.xlu0 %1242
        %v1246 = vsel %vm343, %v507, %v1225
        %v1247 = vsel %vm343, %v555, %v1227
        %vm1248 = vcmask 130048
        %v1249 = vsel %vm1248, %v1246, %v1233
        %v1250 = vsel %vm1248, %v1247, %v1235
        %vm1251 = vcmask 195584
        %v1252 = vsel %vm1251, %v1249, %v1241
        %v1253 = vsel %vm1251, %v1250, %v1243
        %v1254 = vpack.c.bf16 %v1253, %v1252
        %v1255 = vld [vmem:[#allocation7] sm:$0xff]
        %v1256 = vld [vmem:[#allocation7 + $0x8] sm:$0xff]
        %v1257 = vld [vmem:[#allocation7 + $0x10] sm:$0xff]
        %v1258 = vld [vmem:[#allocation7 + $0x18] sm:$0xff]
        %v1259 = vpack.c.bf16 %v1256, %v1255
        %v1260 = vpack.c.bf16 %v1258, %v1257
        %v1261 = vld [vmem:[%s4] sm:$0x1]
        %v1263 = vlaneseq
        %v1264 = vshrl.u32 %v1263, 7
        %v1265 = vsub.s32 0, %v1264
        %v1266 = vrot.slane %v1261, %v1265
        %v1269 = vsel %vm289, %v1254, 0
        %1271 = vmatprep.subr.bf16.mxu0 0
        %1272 = vmatpush1.bf16.msra.mxu0 %v1259
        %1273 = vmatprep.subr.bf16.mxu0 0
        %1274 = vmatpush1.bf16.msra.mxu0 %v1260
        %1275 = vmatprep.subr.bf16.mxu0 0
        %1276 = vmatpush1.bf16.msra.mxu0 0
        %1277 = vmatprep.subr.bf16.mxu0 0
        %1278 = vmatpush1.bf16.msra.mxu0 0
        %1279 = vmatprep.subr.bf16.mxu0 0
        %1280 = vmatpush1.bf16.msra.mxu0 0
        %1281 = vmatprep.subr.bf16.mxu0 0
        %1282 = vmatpush1.bf16.msra.mxu0 0
        %1283 = vmatprep.subr.bf16.mxu0 0
        %1284 = vmatpush1.bf16.msra.mxu0 0
        %1285 = vmatprep.subr.bf16.mxu0 0
        %1286 = vmatpush1.bf16.msra.mxu0 0
        %1287 = vmatprep.subr.bf16.mxu0 0
        %1288 = vmatpush1.bf16.msra.mxu0 0
        %1289 = vmatprep.subr.bf16.mxu0 0
        %1290 = vmatpush1.bf16.msra.mxu0 0
        %1291 = vmatprep.subr.bf16.mxu0 0
        %1292 = vmatpush1.bf16.msra.mxu0 0
        %1293 = vmatprep.subr.bf16.mxu0 0
        %1294 = vmatpush1.bf16.msra.mxu0 0
        %1295 = vmatprep.subr.bf16.mxu0 0
        %1296 = vmatpush1.bf16.msra.mxu0 0
        %1297 = vmatprep.subr.bf16.mxu0 0
        %1298 = vmatpush1.bf16.msra.mxu0 0
        %1299 = vmatprep.subr.bf16.mxu0 0
        %1300 = vmatpush1.bf16.msra.mxu0 0
        %1301 = vmatprep.subr.bf16.mxu0 0
        %1302 = vmatpush1.bf16.msra.mxu0 0
        %1303 = vmatprep.mubr.bf16.mxu0 0
        %1304 = vmatmul.mubr.bf16.gmra.mrb[0].mxu0 %v1269
        %v1305 = vpop.f32.mrb[0].mxu0
        %v1306 = vadd.f32 %v1266, %v1305
        %v1307 = vpop.f32.mrb[0].mxu0
        %v1308 = vpop.f32.mrb[0].mxu0
        %v1309 = vadd.f32 %v1266, %v1308
        %v1310 = vpop.f32.mrb[0].mxu0
        %1311 = vdwg.mxu0
        %1312 = vst.msk [vmem:[%s271] sm:$0xff] %vm289, %v1306
        %1313 = vst.msk [vmem:[%s271 + $0x8] sm:$0xff] %vm289, %v1309
        %s1314 = sand.u32 %s141, 1
        %s1315 = scalar_lea.sflag [#allocation4], %s1314
        %s1316 = sand.u32 %s141, 1
        %s1317 = smul.addr %s1316, 16
        %s1318 = scalar_lea.vmem [#allocation8], %s1317
        // Predicated region
        $region53: #{_lambda_.1} parent=39 // pred_check
          %p1319 = pneg %p151
        $region54: #{_lambda_.1} parent=39 // pred_check_branch
          %1321 = sbr.rel (%p1319) target = $region56
        $region55: #{_lambda_.1} parent=39 // pred_region
          %s1323 = ssub.s32 256, 256
          %1324 = vsyncadd %s1315, %s1323
          %s1325 = smul.addr %s23, 2
          %s1326 = smul.addr %s1325, 128
          %s1327 = scalar_lea.hbm %s5, %s1326
          %s1328 = sshll.u32 %s1318, 4
          %s1329 = int_to_ptr.vmem [resolvable:$true] %s1328
          %1334 = dma.vmem_to_hbm [thread:$0]  %s1329, 256, %s1327, %s1315, 128, 128, 8
        $region56: #{_lambda_.1} parent=39 // pred_fallthru
          _
      $region40: #{_lambda_.1} parent=5 // pred_fallthru
        _
      %p1335 = scmp.le.s32.totalorder 2, %s18
      // Predicated region
      $region57: #{_lambda_.1} parent=5 // pred_check
        %p1336 = pneg %p1335
      $region58: #{_lambda_.1} parent=5 // pred_check_branch
        %1338 = sbr.rel (%p1336) target = $region60
      $region59: #{_lambda_.1} parent=5 // pred_region
        %s1339 = ssub.s32 %s18, 2
        // Predicated region
        $region61: #{_lambda_.1} parent=59 // pred_check
          %p1340 = pneg %p157
        $region62: #{_lambda_.1} parent=59 // pred_check_branch
          %1342 = sbr.rel (%p1340) target = $region64
        $region63: #{_lambda_.1} parent=59 // pred_region
          %s1343 = sand.u32 %s142, 1
          %s1344 = scalar_lea.sflag [#allocation4], %s1343
          %s1345 = sand.u32 %s142, 1
          %s1346 = smul.addr %s1345, 16
          %s1347 = scalar_lea.vmem [#allocation8], %s1346
          %1348 = dma.done %s1344, 256
        $region64: #{_lambda_.1} parent=59 // pred_fallthru
          _
      $region60: #{_lambda_.1} parent=5 // pred_fallthru
        _
    $region6: #{_lambda_.1} parent=1 // loop_footer
      %s22 = sadd.s32 1, %s18
    $region7: #{_lambda_.1} parent=1 // loop_footer_branch
      %17 = sbr.rel target = $region3
    $region8: #{_lambda_.1} parent=1 // loop_exit
      _
    %1349 = vsyncpa [#allocation3], 1
    %s1350 = scalar_lea.sflag [#allocation3], 1
    %1351 = vsyncpa %s1350, 1
    %1352 = vsyncpa [#allocation6], 1
    %1353 = vsyncpa [#allocation4], 1
    %s1354 = scalar_lea.sflag [#allocation4], 1
    %1355 = vsyncpa %s1354, 1

</llo_original>
